<compile_context>
chip_gen: v5e
topology: v5e:2x2
jax: 0.10.0
libtpu: 0.0.40
codegen_flags: <defaults>
</compile_context>

<pallas_src>
import functools

import jax
import jax.numpy as jnp
from jax.experimental import pallas as pl
from jax.experimental.pallas import tpu as pltpu

# ---- stand-in backbone / layout constants -----------------------------------
K_CONV = 3                       # 3x3 convs, stride 2, pad 1
IN_CH = 4                        # raw image channels
C1 = 16                          # conv1 output channels (stand-in)
FEAT = 64                        # conv2 output channels == resnet.fc.in_features stand-in
CPAD = 128                       # lane-dense width for conv2 cout / head tensors
K1 = K_CONV * K_CONV * IN_CH     # 36  : conv1 real contraction (k*k*cin)
K1PAD = 128                      # conv1 K padded once to one lane tile
K2 = K_CONV * K_CONV * C1        # 144 : conv2 real contraction
K2PAD = 256                      # conv2 K padded once to two lane tiles
OH1 = 8                          # conv1 output spatial (16 -> 8)
OH2 = 4                          # conv2 output spatial (8 -> 4)
OW2 = OH2
NPL = OH2 + 1                    # 5   : plane-grid extent of the padded conv1 output
M1 = 4 * NPL * NPL               # 100 : conv1 rows in parity-plane-of-padded-y1 order


# ------------------------------ fused kernel ---------------------------------

def _encoder_kernel(p1_ref, mask_ref, w1_ref, s1_ref, t1_ref,
                    w2_ref, s2_ref, t2_ref,
                    ew_ref, eb_ref, g_ref, beta_ref,
                    o_ref,
                    patch_ref, feats_ref,
                    *, batch, eps):
    """One grid step = one image: conv1 -> conv2 -> pool (rows of feats scratch);
    the Linear + BatchNorm1d head runs on the final grid step over all rows."""
    b = pl.program_id(0)

    @pl.when(b == 0)
    def _init():
        # K-padding columns of the conv2 patch scratch never change; the real
        # 144 columns are fully rewritten every step.
        patch_ref[:, K2:] = jnp.zeros((OH2 * OW2, K2PAD - K2), patch_ref.dtype)
        feats_ref[...] = jnp.zeros((batch, CPAD), jnp.float32)

    # ---- conv1 + folded-BN affine + ReLU: ONE dense big-K matmul -------------
    # p1 rows are ordered as the 4 parity planes of the zero-padded conv1
    # output grid (10x10 -> 4 planes of 5x5), so conv2 taps below are
    # contiguous row runs.  Border rows carry all-zero patches and are forced
    # to exactly 0 by `mask` (they are conv2's zero padding).
    acc1 = jnp.dot(p1_ref[...], w1_ref[...],
                   preferred_element_type=jnp.float32)            # (M1, C1) f32
    y1 = jnp.maximum(acc1 * s1_ref[...] + t1_ref[...], 0.0) * mask_ref[...]

    # ---- conv2: in-VMEM im2col (one materialization) + ONE big-K matmul ------
    # Tap (ki, kj) hits parity plane p at plane offset (qi, qj); for a fixed
    # conv2 output row r it reads a contiguous run of OW2 rows of y1.
    for ki in range(K_CONV):
        for kj in range(K_CONV):
            t = ki * K_CONV + kj
            p = (ki % 2) * 2 + (kj % 2)
            qi, qj = ki // 2, kj // 2
            for r in range(OH2):
                src = (p * NPL + (qi + r)) * NPL + qj
                patch_ref[r * OW2:(r + 1) * OW2, t * C1:(t + 1) * C1] = \
                    y1[src:src + OW2, :]

    patch2 = patch_ref[...].astype(jnp.bfloat16)                  # (16, K2PAD)
    acc2 = jnp.dot(patch2, w2_ref[...],
                   preferred_element_type=jnp.float32)            # (16, CPAD)
    y2 = jnp.maximum(acc2 * s2_ref[...] + t2_ref[...], 0.0)

    # global average pool -> this image's row of the VMEM-resident features
    pooled = jnp.mean(y2, axis=0, keepdims=True)                  # (1, CPAD)
    rows = jax.lax.broadcasted_iota(jnp.int32, (batch, CPAD), 0)
    feats_ref[...] = jnp.where(rows == b, pooled, feats_ref[...])

    # ---- head on the final grid step: Linear + training-mode BatchNorm1d -----
    @pl.when(b == batch - 1)
    def _head():
        feats = feats_ref[...]                                    # (B, CPAD) f32
        emb = jnp.dot(feats.astype(jnp.bfloat16), ew_ref[...],
                      preferred_element_type=jnp.float32) + eb_ref[...]
        mean = jnp.mean(emb, axis=0, keepdims=True)
        cent = emb - mean
        var = jnp.mean(cent * cent, axis=0, keepdims=True)        # biased, like PyTorch
        # padded embed lanes have gamma == 0, so they are exactly 0.
        o_ref[...] = cent * jax.lax.rsqrt(var + eps) * g_ref[...] + beta_ref[...]


# ------------------------------ host-side glue --------------------------------

def _build_conv1_patches(images_nchw):
    """Single host pass over the tiny raw NCHW input: NHWC + pad + im2col
    (K = 3*3*cin = 36) + parity-plane row reorder + one K-pad to 128 + bf16.
    Returns (B, M1, K1PAD) bf16."""
    B = images_nchw.shape[0]
    x = jnp.transpose(images_nchw, (0, 2, 3, 1)).astype(jnp.float32)
    xp = jnp.pad(x, ((0, 0), (1, 1), (1, 1), (0, 0)))             # conv1 zero pad
    taps = []
    for ki in range(K_CONV):
        for kj in range(K_CONV):
            taps.append(xp[:, ki:ki + 2 * OH1 - 1:2, kj:kj + 2 * OH1 - 1:2, :])
    pat = jnp.stack(taps, axis=3).reshape(B, OH1, OH1, K1)        # (B, 8, 8, 36)
    # Zero-pad the conv1 OUTPUT grid (== conv2's padding) and reorder rows into
    # parity planes: padded coord = 2*R + P, row m = ((PI*2+PJ)*NPL + RI)*NPL + RJ
    patp = jnp.pad(pat, ((0, 0), (1, 1), (1, 1), (0, 0)))         # (B, 10, 10, 36)
    patp = patp.reshape(B, NPL, 2, NPL, 2, K1)
    patp = jnp.transpose(patp, (0, 2, 4, 1, 3, 5)).reshape(B, M1, K1)
    p1 = jnp.pad(patp, ((0, 0), (0, 0), (0, K1PAD - K1)))
    return p1.astype(jnp.bfloat16)


def _build_row_mask():
    """(M1, 1) mask: 1.0 for rows that are real conv1 outputs, 0.0 for the
    zero-padding border rows of the padded conv1 output grid."""
    coord = 2 * jnp.arange(NPL)[None, :] + jnp.arange(2)[:, None]   # [P, R] -> coord
    valid = ((coord >= 1) & (coord <= OH1)).astype(jnp.float32)     # (2, NPL)
    m = valid[:, None, :, None] * valid[None, :, None, :]           # (PI, PJ, RI, RJ)
    return m.reshape(M1, 1)


def init_params(key, embed_size):
    ks = jax.random.split(key, 6)

    w1 = 0.05 * jax.random.normal(ks[0], (K_CONV, K_CONV, IN_CH, C1), jnp.float32)
    w1 = jnp.pad(w1.reshape(K1, C1), ((0, K1PAD - K1), (0, 0))).astype(jnp.bfloat16)

    w2 = 0.05 * jax.random.normal(ks[1], (K_CONV, K_CONV, C1, FEAT), jnp.float32)
    w2 = jnp.pad(w2.reshape(K2, FEAT),
                 ((0, K2PAD - K2), (0, CPAD - FEAT))).astype(jnp.bfloat16)

    def affine(kk, cout, cpad):
        ka, kb = jax.random.split(kk)
        # fused scale/shift: folded eval-BN with the conv bias folded into the
        # shift, so the conv epilogue is relu(acc * s + t).
        s = 1.0 + 0.1 * jax.random.normal(ka, (cout,), jnp.float32)
        t = 0.1 * jax.random.normal(kb, (cout,), jnp.float32)
        s = jnp.pad(s, (0, cpad - cout), constant_values=1.0).reshape(1, cpad)
        t = jnp.pad(t, (0, cpad - cout)).reshape(1, cpad)
        return s, t

    s1, t1 = affine(ks[2], C1, C1)
    s2, t2 = affine(ks[3], FEAT, CPAD)

    embed_w = 0.05 * jax.random.normal(ks[4], (FEAT, embed_size), jnp.float32)
    embed_w = jnp.pad(embed_w, ((0, CPAD - FEAT), (0, CPAD - embed_size)))
    embed_b = 0.05 * jax.random.normal(ks[5], (embed_size,), jnp.float32)
    embed_b = jnp.pad(embed_b, (0, CPAD - embed_size)).reshape(1, CPAD)

    # padded embed lanes get gamma = 0 (not 1): BN output is exactly 0 there,
    # so var==0 -> rsqrt(eps) on dead lanes can never leak (review concern).
    bn_gamma = jnp.pad(jnp.ones((embed_size,), jnp.float32),
                       (0, CPAD - embed_size)).reshape(1, CPAD)
    bn_beta = jnp.zeros((1, CPAD), jnp.float32)

    return {
        "w1": w1, "s1": s1, "t1": t1,          # backbone stand-in, stage 1
        "w2": w2, "s2": s2, "t2": t2,          # backbone stand-in, stage 2
        "embed_w": embed_w.astype(jnp.bfloat16),
        "embed_b": embed_b,
        "bn_gamma": bn_gamma,
        "bn_beta": bn_beta,
        "mask1": _build_row_mask(),
    }


@functools.partial(jax.jit, static_argnames=("embed_size",))
def encoder_cnn_forward(params, images_nchw, embed_size):
    """EncoderCNN.forward: resnet(images) -> flatten -> embed -> bn."""
    B = images_nchw.shape[0]
    assert B > 1, "training-mode BatchNorm1d requires batch > 1 (as in PyTorch)"
    assert images_nchw.shape[1] == IN_CH

    p1 = _build_conv1_patches(images_nchw)                # (B, M1, K1PAD) bf16

    out = pl.pallas_call(
        functools.partial(_encoder_kernel, batch=B, eps=1e-5),
        out_shape=jax.ShapeDtypeStruct((B, CPAD), jnp.float32),
        grid=(B,),
        in_specs=[
            pl.BlockSpec((None, M1, K1PAD), lambda b: (b, 0, 0)),   # per-image patches
            pl.BlockSpec((M1, 1), lambda b: (0, 0)),                # border-row mask
            pl.BlockSpec((K1PAD, C1), lambda b: (0, 0)),            # conv1 weight
            pl.BlockSpec((1, C1), lambda b: (0, 0)),                # conv1 scale
            pl.BlockSpec((1, C1), lambda b: (0, 0)),                # conv1 shift
            pl.BlockSpec((K2PAD, CPAD), lambda b: (0, 0)),          # conv2 weight
            pl.BlockSpec((1, CPAD), lambda b: (0, 0)),              # conv2 scale
            pl.BlockSpec((1, CPAD), lambda b: (0, 0)),              # conv2 shift
            pl.BlockSpec((CPAD, CPAD), lambda b: (0, 0)),           # embed weight
            pl.BlockSpec((1, CPAD), lambda b: (0, 0)),              # embed bias
            pl.BlockSpec((1, CPAD), lambda b: (0, 0)),              # bn gamma
            pl.BlockSpec((1, CPAD), lambda b: (0, 0)),              # bn beta
        ],
        out_specs=pl.BlockSpec((B, CPAD), lambda b: (0, 0)),
        scratch_shapes=[
            pltpu.VMEM((OH2 * OW2, K2PAD), jnp.float32),   # conv2 im2col patches
            pltpu.VMEM((B, CPAD), jnp.float32),            # pooled features (B rows)
        ],
        compiler_params=pltpu.CompilerParams(
            # features/output carried across the batch axis -> sequential.
            dimension_semantics=("arbitrary",)),
    )(p1, params["mask1"],
      params["w1"], params["s1"], params["t1"],
      params["w2"], params["s2"], params["t2"],
      params["embed_w"], params["embed_b"],
      params["bn_gamma"], params["bn_beta"])

    return out[:, :embed_size]


if __name__ == "__main__":
    B, C, H, W = 2, 4, 16, 16
    embed_size = 32

    key = jax.random.PRNGKey(0)
    k_img, k_par = jax.random.split(key)
    images = jax.random.normal(k_img, (B, C, H, W), jnp.float32)
    params = init_params(k_par, embed_size)

    out = jax.block_until_ready(encoder_cnn_forward(params, images, embed_size))

    assert out.shape == (B, embed_size) and out.dtype == jnp.float32
    assert bool(jnp.all(jnp.isfinite(out)))
    # training-mode BatchNorm1d with beta == 0  ->  per-feature batch mean ~ 0
    assert float(jnp.max(jnp.abs(jnp.mean(out, axis=0)))) < 1e-2
    print("KERNEL_OK")
</pallas_src>

<mosaic_0001>
module attributes {stable_mosaic.version = 11 : i64} {
  func.func @_encoder_kernel(%arg0: i32, %arg1: memref<1x100x128xbf16, #tpu.memory_space<vmem>>, %arg2: memref<100x1xf32, #tpu.memory_space<vmem>>, %arg3: memref<128x16xbf16, #tpu.memory_space<vmem>>, %arg4: memref<1x16xf32, #tpu.memory_space<vmem>>, %arg5: memref<1x16xf32, #tpu.memory_space<vmem>>, %arg6: memref<256x128xbf16, #tpu.memory_space<vmem>>, %arg7: memref<1x128xf32, #tpu.memory_space<vmem>>, %arg8: memref<1x128xf32, #tpu.memory_space<vmem>>, %arg9: memref<128x128xbf16, #tpu.memory_space<vmem>>, %arg10: memref<1x128xf32, #tpu.memory_space<vmem>>, %arg11: memref<1x128xf32, #tpu.memory_space<vmem>>, %arg12: memref<1x128xf32, #tpu.memory_space<vmem>>, %arg13: memref<2x128xf32, #tpu.memory_space<vmem>>, %arg14: memref<16x256xf32, #tpu.memory_space<vmem>>, %arg15: memref<2x128xf32, #tpu.memory_space<vmem>>) attributes {dimension_semantics = [#tpu.dimension_semantics<arbitrary>], iteration_bounds = array<i64: 2>, scalar_prefetch = 0 : i64, scratch_operands = 2 : i64, tpu.core_type = #tpu.core_type<tc>, window_params = [{transform_indices = @transform_0, window_bounds = array<i64: 1, 100, 128>}, {pipeline_mode = #tpu.pipeline_mode<synchronous>, transform_indices = @transform_1, window_bounds = array<i64: 100, 1>}, {pipeline_mode = #tpu.pipeline_mode<synchronous>, transform_indices = @transform_2, window_bounds = array<i64: 128, 16>}, {pipeline_mode = #tpu.pipeline_mode<synchronous>, transform_indices = @transform_3, window_bounds = array<i64: 1, 16>}, {pipeline_mode = #tpu.pipeline_mode<synchronous>, transform_indices = @transform_4, window_bounds = array<i64: 1, 16>}, {pipeline_mode = #tpu.pipeline_mode<synchronous>, transform_indices = @transform_5, window_bounds = array<i64: 256, 128>}, {pipeline_mode = #tpu.pipeline_mode<synchronous>, transform_indices = @transform_6, window_bounds = array<i64: 1, 128>}, {pipeline_mode = #tpu.pipeline_mode<synchronous>, transform_indices = @transform_7, window_bounds = array<i64: 1, 128>}, {pipeline_mode = #tpu.pipeline_mode<synchronous>, transform_indices = @transform_8, window_bounds = array<i64: 128, 128>}, {pipeline_mode = #tpu.pipeline_mode<synchronous>, transform_indices = @transform_9, window_bounds = array<i64: 1, 128>}, {pipeline_mode = #tpu.pipeline_mode<synchronous>, transform_indices = @transform_10, window_bounds = array<i64: 1, 128>}, {pipeline_mode = #tpu.pipeline_mode<synchronous>, transform_indices = @transform_11, window_bounds = array<i64: 1, 128>}, {pipeline_mode = #tpu.pipeline_mode<synchronous>, transform_indices = @transform_12, window_bounds = array<i64: 2, 128>}]} {
    %c0_i32 = arith.constant 0 : i32
    %0 = arith.cmpi eq, %arg0, %c0_i32 : i32
    %1 = arith.extui %0 : i1 to i32
    %c0_i32_0 = arith.constant 0 : i32
    %2 = arith.cmpi ne, %1, %c0_i32_0 : i32
    scf.if %2 {
      %cst_90 = arith.constant 0.000000e+00 : f32
      %117 = vector.broadcast %cst_90 : f32 to vector<16x112xf32>
      %c0_91 = arith.constant 0 : index
      %c144 = arith.constant 144 : index
      %118 = vector.load %arg14[%c0_91, %c144] : memref<16x256xf32, #tpu.memory_space<vmem>>, vector<16x112xf32>
      tpu.vector_store %arg14[%c0_91, %c144], %117 {strides = array<i32>} : memref<16x256xf32, #tpu.memory_space<vmem>>, vector<16x112xf32>,
      %cst_92 = arith.constant 0.000000e+00 : f32
      %119 = vector.broadcast %cst_92 : f32 to vector<2x128xf32>
      %c0_93 = arith.constant 0 : index
      %c0_94 = arith.constant 0 : index
      %120 = vector.load %arg15[%c0_93, %c0_94] : memref<2x128xf32, #tpu.memory_space<vmem>>, vector<2x128xf32>
      tpu.vector_store %arg15[%c0_93, %c0_94], %119 {strides = array<i32>} : memref<2x128xf32, #tpu.memory_space<vmem>>, vector<2x128xf32>,
    } else {
    }
    %c0 = arith.constant 0 : index
    %c0_1 = arith.constant 0 : index
    %c0_2 = arith.constant 0 : index
    %3 = vector.load %arg1[%c0, %c0_1, %c0_2] : memref<1x100x128xbf16, #tpu.memory_space<vmem>>, vector<1x100x128xbf16>
    %4 = vector.shape_cast %3 : vector<1x100x128xbf16> to vector<100x128xbf16>
    %c0_3 = arith.constant 0 : index
    %c0_4 = arith.constant 0 : index
    %5 = vector.load %arg3[%c0_3, %c0_4] : memref<128x16xbf16, #tpu.memory_space<vmem>>, vector<128x16xbf16>
    %cst = arith.constant dense<0.000000e+00> : vector<100x16xf32>
    %6 = tpu.matmul %4, %5, %cst {dimension_numbers = #tpu.dot_dimension_numbers<[1], [0], [0], [1], [0, 0, 1, 1], [], []>} : vector<100x128xbf16>, vector<128x16xbf16>, vector<100x16xf32> -> vector<100x16xf32>
    %c0_5 = arith.constant 0 : index
    %c0_6 = arith.constant 0 : index
    %7 = vector.load %arg4[%c0_5, %c0_6] : memref<1x16xf32, #tpu.memory_space<vmem>>, vector<1x16xf32>
    %8 = vector.broadcast %7 : vector<1x16xf32> to vector<100x16xf32>
    %9 = arith.mulf %6, %8 : vector<100x16xf32>
    %c0_7 = arith.constant 0 : index
    %c0_8 = arith.constant 0 : index
    %10 = vector.load %arg5[%c0_7, %c0_8] : memref<1x16xf32, #tpu.memory_space<vmem>>, vector<1x16xf32>
    %11 = vector.broadcast %10 : vector<1x16xf32> to vector<100x16xf32>
    %12 = arith.addf %9, %11 : vector<100x16xf32>
    %cst_9 = arith.constant 0.000000e+00 : f32
    %13 = vector.broadcast %cst_9 : f32 to vector<100x16xf32>
    %14 = arith.maximumf %12, %13 : vector<100x16xf32>
    %c0_10 = arith.constant 0 : index
    %c0_11 = arith.constant 0 : index
    %15 = vector.load %arg2[%c0_10, %c0_11] : memref<100x1xf32, #tpu.memory_space<vmem>>, vector<100x1xf32>
    %16 = vector.broadcast %15 : vector<100x1xf32> to vector<100x16xf32>
    %17 = arith.mulf %14, %16 : vector<100x16xf32>
    %18 = vector.extract_strided_slice %17 {offsets = [0, 0], sizes = [4, 16], strides = [1, 1]} : vector<100x16xf32> to vector<4x16xf32>
    %c0_12 = arith.constant 0 : index
    %c0_13 = arith.constant 0 : index
    %19 = vector.load %arg14[%c0_12, %c0_13] : memref<16x256xf32, #tpu.memory_space<vmem>>, vector<4x16xf32>
    tpu.vector_store %arg14[%c0_12, %c0_13], %18 {strides = array<i32>} : memref<16x256xf32, #tpu.memory_space<vmem>>, vector<4x16xf32>,
    %20 = vector.extract_strided_slice %17 {offsets = [5, 0], sizes = [4, 16], strides = [1, 1]} : vector<100x16xf32> to vector<4x16xf32>
    %c4 = arith.constant 4 : index
    %c0_14 = arith.constant 0 : index
    %21 = vector.load %arg14[%c4, %c0_14] : memref<16x256xf32, #tpu.memory_space<vmem>>, vector<4x16xf32>
    tpu.vector_store %arg14[%c4, %c0_14], %20 {strides = array<i32>} : memref<16x256xf32, #tpu.memory_space<vmem>>, vector<4x16xf32>,
    %22 = vector.extract_strided_slice %17 {offsets = [10, 0], sizes = [4, 16], strides = [1, 1]} : vector<100x16xf32> to vector<4x16xf32>
    %c8 = arith.constant 8 : index
    %c0_15 = arith.constant 0 : index
    %23 = vector.load %arg14[%c8, %c0_15] : memref<16x256xf32, #tpu.memory_space<vmem>>, vector<4x16xf32>
    tpu.vector_store %arg14[%c8, %c0_15], %22 {strides = array<i32>} : memref<16x256xf32, #tpu.memory_space<vmem>>, vector<4x16xf32>,
    %24 = vector.extract_strided_slice %17 {offsets = [15, 0], sizes = [4, 16], strides = [1, 1]} : vector<100x16xf32> to vector<4x16xf32>
    %c12 = arith.constant 12 : index
    %c0_16 = arith.constant 0 : index
    %25 = vector.load %arg14[%c12, %c0_16] : memref<16x256xf32, #tpu.memory_space<vmem>>, vector<4x16xf32>
    tpu.vector_store %arg14[%c12, %c0_16], %24 {strides = array<i32>} : memref<16x256xf32, #tpu.memory_space<vmem>>, vector<4x16xf32>,
    %26 = vector.extract_strided_slice %17 {offsets = [25, 0], sizes = [4, 16], strides = [1, 1]} : vector<100x16xf32> to vector<4x16xf32>
    %c0_17 = arith.constant 0 : index
    %c16 = arith.constant 16 : index
    %27 = vector.load %arg14[%c0_17, %c16] : memref<16x256xf32, #tpu.memory_space<vmem>>, vector<4x16xf32>
    tpu.vector_store %arg14[%c0_17, %c16], %26 {strides = array<i32>} : memref<16x256xf32, #tpu.memory_space<vmem>>, vector<4x16xf32>,
    %28 = vector.extract_strided_slice %17 {offsets = [30, 0], sizes = [4, 16], strides = [1, 1]} : vector<100x16xf32> to vector<4x16xf32>
    %c4_18 = arith.constant 4 : index
    %c16_19 = arith.constant 16 : index
    %29 = vector.load %arg14[%c4_18, %c16_19] : memref<16x256xf32, #tpu.memory_space<vmem>>, vector<4x16xf32>
    tpu.vector_store %arg14[%c4_18, %c16_19], %28 {strides = array<i32>} : memref<16x256xf32, #tpu.memory_space<vmem>>, vector<4x16xf32>,
    %30 = vector.extract_strided_slice %17 {offsets = [35, 0], sizes = [4, 16], strides = [1, 1]} : vector<100x16xf32> to vector<4x16xf32>
    %c8_20 = arith.constant 8 : index
    %c16_21 = arith.constant 16 : index
    %31 = vector.load %arg14[%c8_20, %c16_21] : memref<16x256xf32, #tpu.memory_space<vmem>>, vector<4x16xf32>
    tpu.vector_store %arg14[%c8_20, %c16_21], %30 {strides = array<i32>} : memref<16x256xf32, #tpu.memory_space<vmem>>, vector<4x16xf32>,
    %32 = vector.extract_strided_slice %17 {offsets = [40, 0], sizes = [4, 16], strides = [1, 1]} : vector<100x16xf32> to vector<4x16xf32>
    %c12_22 = arith.constant 12 : index
    %c16_23 = arith.constant 16 : index
    %33 = vector.load %arg14[%c12_22, %c16_23] : memref<16x256xf32, #tpu.memory_space<vmem>>, vector<4x16xf32>
    tpu.vector_store %arg14[%c12_22, %c16_23], %32 {strides = array<i32>} : memref<16x256xf32, #tpu.memory_space<vmem>>, vector<4x16xf32>,
    %34 = vector.extract_strided_slice %17 {offsets = [1, 0], sizes = [4, 16], strides = [1, 1]} : vector<100x16xf32> to vector<4x16xf32>
    %c0_24 = arith.constant 0 : index
    %c32 = arith.constant 32 : index
    %35 = vector.load %arg14[%c0_24, %c32] : memref<16x256xf32, #tpu.memory_space<vmem>>, vector<4x16xf32>
    tpu.vector_store %arg14[%c0_24, %c32], %34 {strides = array<i32>} : memref<16x256xf32, #tpu.memory_space<vmem>>, vector<4x16xf32>,
    %36 = vector.extract_strided_slice %17 {offsets = [6, 0], sizes = [4, 16], strides = [1, 1]} : vector<100x16xf32> to vector<4x16xf32>
    %c4_25 = arith.constant 4 : index
    %c32_26 = arith.constant 32 : index
    %37 = vector.load %arg14[%c4_25, %c32_26] : memref<16x256xf32, #tpu.memory_space<vmem>>, vector<4x16xf32>
    tpu.vector_store %arg14[%c4_25, %c32_26], %36 {strides = array<i32>} : memref<16x256xf32, #tpu.memory_space<vmem>>, vector<4x16xf32>,
    %38 = vector.extract_strided_slice %17 {offsets = [11, 0], sizes = [4, 16], strides = [1, 1]} : vector<100x16xf32> to vector<4x16xf32>
    %c8_27 = arith.constant 8 : index
    %c32_28 = arith.constant 32 : index
    %39 = vector.load %arg14[%c8_27, %c32_28] : memref<16x256xf32, #tpu.memory_space<vmem>>, vector<4x16xf32>
    tpu.vector_store %arg14[%c8_27, %c32_28], %38 {strides = array<i32>} : memref<16x256xf32, #tpu.memory_space<vmem>>, vector<4x16xf32>,
    %40 = vector.extract_strided_slice %17 {offsets = [16, 0], sizes = [4, 16], strides = [1, 1]} : vector<100x16xf32> to vector<4x16xf32>
    %c12_29 = arith.constant 12 : index
    %c32_30 = arith.constant 32 : index
    %41 = vector.load %arg14[%c12_29, %c32_30] : memref<16x256xf32, #tpu.memory_space<vmem>>, vector<4x16xf32>
    tpu.vector_store %arg14[%c12_29, %c32_30], %40 {strides = array<i32>} : memref<16x256xf32, #tpu.memory_space<vmem>>, vector<4x16xf32>,
    %42 = vector.extract_strided_slice %17 {offsets = [50, 0], sizes = [4, 16], strides = [1, 1]} : vector<100x16xf32> to vector<4x16xf32>
    %c0_31 = arith.constant 0 : index
    %c48 = arith.constant 48 : index
    %43 = vector.load %arg14[%c0_31, %c48] : memref<16x256xf32, #tpu.memory_space<vmem>>, vector<4x16xf32>
    tpu.vector_store %arg14[%c0_31, %c48], %42 {strides = array<i32>} : memref<16x256xf32, #tpu.memory_space<vmem>>, vector<4x16xf32>,
    %44 = vector.extract_strided_slice %17 {offsets = [55, 0], sizes = [4, 16], strides = [1, 1]} : vector<100x16xf32> to vector<4x16xf32>
    %c4_32 = arith.constant 4 : index
    %c48_33 = arith.constant 48 : index
    %45 = vector.load %arg14[%c4_32, %c48_33] : memref<16x256xf32, #tpu.memory_space<vmem>>, vector<4x16xf32>
    tpu.vector_store %arg14[%c4_32, %c48_33], %44 {strides = array<i32>} : memref<16x256xf32, #tpu.memory_space<vmem>>, vector<4x16xf32>,
    %46 = vector.extract_strided_slice %17 {offsets = [60, 0], sizes = [4, 16], strides = [1, 1]} : vector<100x16xf32> to vector<4x16xf32>
    %c8_34 = arith.constant 8 : index
    %c48_35 = arith.constant 48 : index
    %47 = vector.load %arg14[%c8_34, %c48_35] : memref<16x256xf32, #tpu.memory_space<vmem>>, vector<4x16xf32>
    tpu.vector_store %arg14[%c8_34, %c48_35], %46 {strides = array<i32>} : memref<16x256xf32, #tpu.memory_space<vmem>>, vector<4x16xf32>,
    %48 = vector.extract_strided_slice %17 {offsets = [65, 0], sizes = [4, 16], strides = [1, 1]} : vector<100x16xf32> to vector<4x16xf32>
    %c12_36 = arith.constant 12 : index
    %c48_37 = arith.constant 48 : index
    %49 = vector.load %arg14[%c12_36, %c48_37] : memref<16x256xf32, #tpu.memory_space<vmem>>, vector<4x16xf32>
    tpu.vector_store %arg14[%c12_36, %c48_37], %48 {strides = array<i32>} : memref<16x256xf32, #tpu.memory_space<vmem>>, vector<4x16xf32>,
    %50 = vector.extract_strided_slice %17 {offsets = [75, 0], sizes = [4, 16], strides = [1, 1]} : vector<100x16xf32> to vector<4x16xf32>
    %c0_38 = arith.constant 0 : index
    %c64 = arith.constant 64 : index
    %51 = vector.load %arg14[%c0_38, %c64] : memref<16x256xf32, #tpu.memory_space<vmem>>, vector<4x16xf32>
    tpu.vector_store %arg14[%c0_38, %c64], %50 {strides = array<i32>} : memref<16x256xf32, #tpu.memory_space<vmem>>, vector<4x16xf32>,
    %52 = vector.extract_strided_slice %17 {offsets = [80, 0], sizes = [4, 16], strides = [1, 1]} : vector<100x16xf32> to vector<4x16xf32>
    %c4_39 = arith.constant 4 : index
    %c64_40 = arith.constant 64 : index
    %53 = vector.load %arg14[%c4_39, %c64_40] : memref<16x256xf32, #tpu.memory_space<vmem>>, vector<4x16xf32>
    tpu.vector_store %arg14[%c4_39, %c64_40], %52 {strides = array<i32>} : memref<16x256xf32, #tpu.memory_space<vmem>>, vector<4x16xf32>,
    %54 = vector.extract_strided_slice %17 {offsets = [85, 0], sizes = [4, 16], strides = [1, 1]} : vector<100x16xf32> to vector<4x16xf32>
    %c8_41 = arith.constant 8 : index
    %c64_42 = arith.constant 64 : index
    %55 = vector.load %arg14[%c8_41, %c64_42] : memref<16x256xf32, #tpu.memory_space<vmem>>, vector<4x16xf32>
    tpu.vector_store %arg14[%c8_41, %c64_42], %54 {strides = array<i32>} : memref<16x256xf32, #tpu.memory_space<vmem>>, vector<4x16xf32>,
    %56 = vector.extract_strided_slice %17 {offsets = [90, 0], sizes = [4, 16], strides = [1, 1]} : vector<100x16xf32> to vector<4x16xf32>
    %c12_43 = arith.constant 12 : index
    %c64_44 = arith.constant 64 : index
    %57 = vector.load %arg14[%c12_43, %c64_44] : memref<16x256xf32, #tpu.memory_space<vmem>>, vector<4x16xf32>
    tpu.vector_store %arg14[%c12_43, %c64_44], %56 {strides = array<i32>} : memref<16x256xf32, #tpu.memory_space<vmem>>, vector<4x16xf32>,
    %58 = vector.extract_strided_slice %17 {offsets = [51, 0], sizes = [4, 16], strides = [1, 1]} : vector<100x16xf32> to vector<4x16xf32>
    %c0_45 = arith.constant 0 : index
    %c80 = arith.constant 80 : index
    %59 = vector.load %arg14[%c0_45, %c80] : memref<16x256xf32, #tpu.memory_space<vmem>>, vector<4x16xf32>
    tpu.vector_store %arg14[%c0_45, %c80], %58 {strides = array<i32>} : memref<16x256xf32, #tpu.memory_space<vmem>>, vector<4x16xf32>,
    %60 = vector.extract_strided_slice %17 {offsets = [56, 0], sizes = [4, 16], strides = [1, 1]} : vector<100x16xf32> to vector<4x16xf32>
    %c4_46 = arith.constant 4 : index
    %c80_47 = arith.constant 80 : index
    %61 = vector.load %arg14[%c4_46, %c80_47] : memref<16x256xf32, #tpu.memory_space<vmem>>, vector<4x16xf32>
    tpu.vector_store %arg14[%c4_46, %c80_47], %60 {strides = array<i32>} : memref<16x256xf32, #tpu.memory_space<vmem>>, vector<4x16xf32>,
    %62 = vector.extract_strided_slice %17 {offsets = [61, 0], sizes = [4, 16], strides = [1, 1]} : vector<100x16xf32> to vector<4x16xf32>
    %c8_48 = arith.constant 8 : index
    %c80_49 = arith.constant 80 : index
    %63 = vector.load %arg14[%c8_48, %c80_49] : memref<16x256xf32, #tpu.memory_space<vmem>>, vector<4x16xf32>
    tpu.vector_store %arg14[%c8_48, %c80_49], %62 {strides = array<i32>} : memref<16x256xf32, #tpu.memory_space<vmem>>, vector<4x16xf32>,
    %64 = vector.extract_strided_slice %17 {offsets = [66, 0], sizes = [4, 16], strides = [1, 1]} : vector<100x16xf32> to vector<4x16xf32>
    %c12_50 = arith.constant 12 : index
    %c80_51 = arith.constant 80 : index
    %65 = vector.load %arg14[%c12_50, %c80_51] : memref<16x256xf32, #tpu.memory_space<vmem>>, vector<4x16xf32>
    tpu.vector_store %arg14[%c12_50, %c80_51], %64 {strides = array<i32>} : memref<16x256xf32, #tpu.memory_space<vmem>>, vector<4x16xf32>,
    %66 = vector.extract_strided_slice %17 {offsets = [5, 0], sizes = [4, 16], strides = [1, 1]} : vector<100x16xf32> to vector<4x16xf32>
    %c0_52 = arith.constant 0 : index
    %c96 = arith.constant 96 : index
    %67 = vector.load %arg14[%c0_52, %c96] : memref<16x256xf32, #tpu.memory_space<vmem>>, vector<4x16xf32>
    tpu.vector_store %arg14[%c0_52, %c96], %66 {strides = array<i32>} : memref<16x256xf32, #tpu.memory_space<vmem>>, vector<4x16xf32>,
    %68 = vector.extract_strided_slice %17 {offsets = [10, 0], sizes = [4, 16], strides = [1, 1]} : vector<100x16xf32> to vector<4x16xf32>
    %c4_53 = arith.constant 4 : index
    %c96_54 = arith.constant 96 : index
    %69 = vector.load %arg14[%c4_53, %c96_54] : memref<16x256xf32, #tpu.memory_space<vmem>>, vector<4x16xf32>
    tpu.vector_store %arg14[%c4_53, %c96_54], %68 {strides = array<i32>} : memref<16x256xf32, #tpu.memory_space<vmem>>, vector<4x16xf32>,
    %70 = vector.extract_strided_slice %17 {offsets = [15, 0], sizes = [4, 16], strides = [1, 1]} : vector<100x16xf32> to vector<4x16xf32>
    %c8_55 = arith.constant 8 : index
    %c96_56 = arith.constant 96 : index
    %71 = vector.load %arg14[%c8_55, %c96_56] : memref<16x256xf32, #tpu.memory_space<vmem>>, vector<4x16xf32>
    tpu.vector_store %arg14[%c8_55, %c96_56], %70 {strides = array<i32>} : memref<16x256xf32, #tpu.memory_space<vmem>>, vector<4x16xf32>,
    %72 = vector.extract_strided_slice %17 {offsets = [20, 0], sizes = [4, 16], strides = [1, 1]} : vector<100x16xf32> to vector<4x16xf32>
    %c12_57 = arith.constant 12 : index
    %c96_58 = arith.constant 96 : index
    %73 = vector.load %arg14[%c12_57, %c96_58] : memref<16x256xf32, #tpu.memory_space<vmem>>, vector<4x16xf32>
    tpu.vector_store %arg14[%c12_57, %c96_58], %72 {strides = array<i32>} : memref<16x256xf32, #tpu.memory_space<vmem>>, vector<4x16xf32>,
    %74 = vector.extract_strided_slice %17 {offsets = [30, 0], sizes = [4, 16], strides = [1, 1]} : vector<100x16xf32> to vector<4x16xf32>
    %c0_59 = arith.constant 0 : index
    %c112 = arith.constant 112 : index
    %75 = vector.load %arg14[%c0_59, %c112] : memref<16x256xf32, #tpu.memory_space<vmem>>, vector<4x16xf32>
    tpu.vector_store %arg14[%c0_59, %c112], %74 {strides = array<i32>} : memref<16x256xf32, #tpu.memory_space<vmem>>, vector<4x16xf32>,
    %76 = vector.extract_strided_slice %17 {offsets = [35, 0], sizes = [4, 16], strides = [1, 1]} : vector<100x16xf32> to vector<4x16xf32>
    %c4_60 = arith.constant 4 : index
    %c112_61 = arith.constant 112 : index
    %77 = vector.load %arg14[%c4_60, %c112_61] : memref<16x256xf32, #tpu.memory_space<vmem>>, vector<4x16xf32>
    tpu.vector_store %arg14[%c4_60, %c112_61], %76 {strides = array<i32>} : memref<16x256xf32, #tpu.memory_space<vmem>>, vector<4x16xf32>,
    %78 = vector.extract_strided_slice %17 {offsets = [40, 0], sizes = [4, 16], strides = [1, 1]} : vector<100x16xf32> to vector<4x16xf32>
    %c8_62 = arith.constant 8 : index
    %c112_63 = arith.constant 112 : index
    %79 = vector.load %arg14[%c8_62, %c112_63] : memref<16x256xf32, #tpu.memory_space<vmem>>, vector<4x16xf32>
    tpu.vector_store %arg14[%c8_62, %c112_63], %78 {strides = array<i32>} : memref<16x256xf32, #tpu.memory_space<vmem>>, vector<4x16xf32>,
    %80 = vector.extract_strided_slice %17 {offsets = [45, 0], sizes = [4, 16], strides = [1, 1]} : vector<100x16xf32> to vector<4x16xf32>
    %c12_64 = arith.constant 12 : index
    %c112_65 = arith.constant 112 : index
    %81 = vector.load %arg14[%c12_64, %c112_65] : memref<16x256xf32, #tpu.memory_space<vmem>>, vector<4x16xf32>
    tpu.vector_store %arg14[%c12_64, %c112_65], %80 {strides = array<i32>} : memref<16x256xf32, #tpu.memory_space<vmem>>, vector<4x16xf32>,
    %82 = vector.extract_strided_slice %17 {offsets = [6, 0], sizes = [4, 16], strides = [1, 1]} : vector<100x16xf32> to vector<4x16xf32>
    %c0_66 = arith.constant 0 : index
    %c128 = arith.constant 128 : index
    %83 = vector.load %arg14[%c0_66, %c128] : memref<16x256xf32, #tpu.memory_space<vmem>>, vector<4x16xf32>
    tpu.vector_store %arg14[%c0_66, %c128], %82 {strides = array<i32>} : memref<16x256xf32, #tpu.memory_space<vmem>>, vector<4x16xf32>,
    %84 = vector.extract_strided_slice %17 {offsets = [11, 0], sizes = [4, 16], strides = [1, 1]} : vector<100x16xf32> to vector<4x16xf32>
    %c4_67 = arith.constant 4 : index
    %c128_68 = arith.constant 128 : index
    %85 = vector.load %arg14[%c4_67, %c128_68] : memref<16x256xf32, #tpu.memory_space<vmem>>, vector<4x16xf32>
    tpu.vector_store %arg14[%c4_67, %c128_68], %84 {strides = array<i32>} : memref<16x256xf32, #tpu.memory_space<vmem>>, vector<4x16xf32>,
    %86 = vector.extract_strided_slice %17 {offsets = [16, 0], sizes = [4, 16], strides = [1, 1]} : vector<100x16xf32> to vector<4x16xf32>
    %c8_69 = arith.constant 8 : index
    %c128_70 = arith.constant 128 : index
    %87 = vector.load %arg14[%c8_69, %c128_70] : memref<16x256xf32, #tpu.memory_space<vmem>>, vector<4x16xf32>
    tpu.vector_store %arg14[%c8_69, %c128_70], %86 {strides = array<i32>} : memref<16x256xf32, #tpu.memory_space<vmem>>, vector<4x16xf32>,
    %88 = vector.extract_strided_slice %17 {offsets = [21, 0], sizes = [4, 16], strides = [1, 1]} : vector<100x16xf32> to vector<4x16xf32>
    %c12_71 = arith.constant 12 : index
    %c128_72 = arith.constant 128 : index
    %89 = vector.load %arg14[%c12_71, %c128_72] : memref<16x256xf32, #tpu.memory_space<vmem>>, vector<4x16xf32>
    tpu.vector_store %arg14[%c12_71, %c128_72], %88 {strides = array<i32>} : memref<16x256xf32, #tpu.memory_space<vmem>>, vector<4x16xf32>,
    %c0_73 = arith.constant 0 : index
    %c0_74 = arith.constant 0 : index
    %90 = vector.load %arg14[%c0_73, %c0_74] : memref<16x256xf32, #tpu.memory_space<vmem>>, vector<16x256xf32>
    %91 = arith.truncf %90 : vector<16x256xf32> to vector<16x256xbf16>
    %c0_75 = arith.constant 0 : index
    %c0_76 = arith.constant 0 : index
    %92 = vector.load %arg6[%c0_75, %c0_76] : memref<256x128xbf16, #tpu.memory_space<vmem>>, vector<256x128xbf16>
    %cst_77 = arith.constant dense<0.000000e+00> : vector<16x128xf32>
    %93 = tpu.matmul %91, %92, %cst_77 {dimension_numbers = #tpu.dot_dimension_numbers<[1], [0], [0], [1], [0, 0, 1, 1], [], []>} : vector<16x256xbf16>, vector<256x128xbf16>, vector<16x128xf32> -> vector<16x128xf32>
    %c0_78 = arith.constant 0 : index
    %c0_79 = arith.constant 0 : index
    %94 = vector.load %arg7[%c0_78, %c0_79] : memref<1x128xf32, #tpu.memory_space<vmem>>, vector<1x128xf32>
    %95 = vector.broadcast %94 : vector<1x128xf32> to vector<16x128xf32>
    %96 = arith.mulf %93, %95 : vector<16x128xf32>
    %c0_80 = arith.constant 0 : index
    %c0_81 = arith.constant 0 : index
    %97 = vector.load %arg8[%c0_80, %c0_81] : memref<1x128xf32, #tpu.memory_space<vmem>>, vector<1x128xf32>
    %98 = vector.broadcast %97 : vector<1x128xf32> to vector<16x128xf32>
    %99 = arith.addf %96, %98 : vector<16x128xf32>
    %cst_82 = arith.constant 0.000000e+00 : f32
    %100 = vector.broadcast %cst_82 : f32 to vector<16x128xf32>
    %101 = arith.maximumf %99, %100 : vector<16x128xf32>
    %cst_83 = arith.constant dense<0.000000e+00> : vector<128xf32>
    %102 = vector.multi_reduction <add>, %101, %cst_83 [0] : vector<16x128xf32> to vector<128xf32>
    %103 = vector.shape_cast %102 : vector<128xf32> to vector<1x128xf32>
    %cst_84 = arith.constant 1.600000e+01 : f32
    %104 = vector.broadcast %cst_84 : f32 to vector<1x128xf32>
    %105 = arith.divf %103, %104 : vector<1x128xf32>
    %106 = tpu.iota {dimensions = array<i32: 0>} : vector<2x128xi32>
    %107 = vector.broadcast %arg0 : i32 to vector<2x128xi32>
    %108 = arith.cmpi eq, %106, %107 : vector<2x128xi32>
    %c0_85 = arith.constant 0 : index
    %c0_86 = arith.constant 0 : index
    %109 = vector.load %arg15[%c0_85, %c0_86] : memref<2x128xf32, #tpu.memory_space<vmem>>, vector<2x128xf32>
    %110 = vector.shape_cast %105 : vector<1x128xf32> to vector<1x128xf32>
    %111 = vector.broadcast %110 : vector<1x128xf32> to vector<2x128xf32>
    %112 = arith.select %108, %111, %109 : vector<2x128xi1>, vector<2x128xf32>
    %c0_87 = arith.constant 0 : index
    %c0_88 = arith.constant 0 : index
    %113 = vector.load %arg15[%c0_87, %c0_88] : memref<2x128xf32, #tpu.memory_space<vmem>>, vector<2x128xf32>
    tpu.vector_store %arg15[%c0_87, %c0_88], %112 {strides = array<i32>} : memref<2x128xf32, #tpu.memory_space<vmem>>, vector<2x128xf32>,
    %c1_i32 = arith.constant 1 : i32
    %114 = arith.cmpi eq, %arg0, %c1_i32 : i32
    %115 = arith.extui %114 : i1 to i32
    %c0_i32_89 = arith.constant 0 : i32
    %116 = arith.cmpi ne, %115, %c0_i32_89 : i32
    scf.if %116 {
      %c0_90 = arith.constant 0 : index
      %c0_91 = arith.constant 0 : index
      %117 = vector.load %arg15[%c0_90, %c0_91] : memref<2x128xf32, #tpu.memory_space<vmem>>, vector<2x128xf32>
      %118 = arith.truncf %117 : vector<2x128xf32> to vector<2x128xbf16>
      %c0_92 = arith.constant 0 : index
      %c0_93 = arith.constant 0 : index
      %119 = vector.load %arg9[%c0_92, %c0_93] : memref<128x128xbf16, #tpu.memory_space<vmem>>, vector<128x128xbf16>
      %cst_94 = arith.constant dense<0.000000e+00> : vector<2x128xf32>
      %120 = tpu.matmul %118, %119, %cst_94 {dimension_numbers = #tpu.dot_dimension_numbers<[1], [0], [0], [1], [0, 0, 1, 1], [], []>} : vector<2x128xbf16>, vector<128x128xbf16>, vector<2x128xf32> -> vector<2x128xf32>
      %c0_95 = arith.constant 0 : index
      %c0_96 = arith.constant 0 : index
      %121 = vector.load %arg10[%c0_95, %c0_96] : memref<1x128xf32, #tpu.memory_space<vmem>>, vector<1x128xf32>
      %122 = vector.broadcast %121 : vector<1x128xf32> to vector<2x128xf32>
      %123 = arith.addf %120, %122 : vector<2x128xf32>
      %cst_97 = arith.constant dense<0.000000e+00> : vector<128xf32>
      %124 = vector.multi_reduction <add>, %123, %cst_97 [0] : vector<2x128xf32> to vector<128xf32>
      %125 = vector.shape_cast %124 : vector<128xf32> to vector<1x128xf32>
      %cst_98 = arith.constant 2.000000e+00 : f32
      %126 = vector.broadcast %cst_98 : f32 to vector<1x128xf32>
      %127 = arith.divf %125, %126 : vector<1x128xf32>
      %128 = vector.broadcast %127 : vector<1x128xf32> to vector<2x128xf32>
      %129 = arith.subf %123, %128 : vector<2x128xf32>
      %130 = arith.mulf %129, %129 : vector<2x128xf32>
      %cst_99 = arith.constant dense<0.000000e+00> : vector<128xf32>
      %131 = vector.multi_reduction <add>, %130, %cst_99 [0] : vector<2x128xf32> to vector<128xf32>
      %132 = vector.shape_cast %131 : vector<128xf32> to vector<1x128xf32>
      %cst_100 = arith.constant 2.000000e+00 : f32
      %133 = vector.broadcast %cst_100 : f32 to vector<1x128xf32>
      %134 = arith.divf %132, %133 : vector<1x128xf32>
      %cst_101 = arith.constant 9.99999974E-6 : f32
      %135 = vector.broadcast %cst_101 : f32 to vector<1x128xf32>
      %136 = arith.addf %134, %135 : vector<1x128xf32>
      %137 = math.rsqrt %136 : vector<1x128xf32>
      %138 = vector.broadcast %137 : vector<1x128xf32> to vector<2x128xf32>
      %139 = arith.mulf %129, %138 : vector<2x128xf32>
      %c0_102 = arith.constant 0 : index
      %c0_103 = arith.constant 0 : index
      %140 = vector.load %arg11[%c0_102, %c0_103] : memref<1x128xf32, #tpu.memory_space<vmem>>, vector<1x128xf32>
      %141 = vector.broadcast %140 : vector<1x128xf32> to vector<2x128xf32>
      %142 = arith.mulf %139, %141 : vector<2x128xf32>
      %c0_104 = arith.constant 0 : index
      %c0_105 = arith.constant 0 : index
      %143 = vector.load %arg12[%c0_104, %c0_105] : memref<1x128xf32, #tpu.memory_space<vmem>>, vector<1x128xf32>
      %144 = vector.broadcast %143 : vector<1x128xf32> to vector<2x128xf32>
      %145 = arith.addf %142, %144 : vector<2x128xf32>
      %c0_106 = arith.constant 0 : index
      %c0_107 = arith.constant 0 : index
      %146 = vector.load %arg13[%c0_106, %c0_107] : memref<2x128xf32, #tpu.memory_space<vmem>>, vector<2x128xf32>
      tpu.vector_store %arg13[%c0_106, %c0_107], %145 {strides = array<i32>} : memref<2x128xf32, #tpu.memory_space<vmem>>, vector<2x128xf32>,
    } else {
    }
    return
  }
  func.func @transform_0(%arg0: i32) -> (i32, i32, i32) {
    %c0_i32 = arith.constant 0 : i32
    %c0_i32_0 = arith.constant 0 : i32
    %c0_i32_1 = arith.constant 0 : i32
    return %arg0, %c0_i32, %c0_i32_0 : i32, i32, i32
  }
  func.func @transform_1(%arg0: i32) -> (i32, i32) {
    %c0_i32 = arith.constant 0 : i32
    %c0_i32_0 = arith.constant 0 : i32
    %c0_i32_1 = arith.constant 0 : i32
    return %c0_i32, %c0_i32_0 : i32, i32
  }
  func.func @transform_2(%arg0: i32) -> (i32, i32) {
    %c0_i32 = arith.constant 0 : i32
    %c0_i32_0 = arith.constant 0 : i32
    %c0_i32_1 = arith.constant 0 : i32
    return %c0_i32, %c0_i32_0 : i32, i32
  }
  func.func @transform_3(%arg0: i32) -> (i32, i32) {
    %c0_i32 = arith.constant 0 : i32
    %c0_i32_0 = arith.constant 0 : i32
    %c0_i32_1 = arith.constant 0 : i32
    return %c0_i32, %c0_i32_0 : i32, i32
  }
  func.func @transform_4(%arg0: i32) -> (i32, i32) {
    %c0_i32 = arith.constant 0 : i32
    %c0_i32_0 = arith.constant 0 : i32
    %c0_i32_1 = arith.constant 0 : i32
    return %c0_i32, %c0_i32_0 : i32, i32
  }
  func.func @transform_5(%arg0: i32) -> (i32, i32) {
    %c0_i32 = arith.constant 0 : i32
    %c0_i32_0 = arith.constant 0 : i32
    %c0_i32_1 = arith.constant 0 : i32
    return %c0_i32, %c0_i32_0 : i32, i32
  }
  func.func @transform_6(%arg0: i32) -> (i32, i32) {
    %c0_i32 = arith.constant 0 : i32
    %c0_i32_0 = arith.constant 0 : i32
    %c0_i32_1 = arith.constant 0 : i32
    return %c0_i32, %c0_i32_0 : i32, i32
  }
  func.func @transform_7(%arg0: i32) -> (i32, i32) {
    %c0_i32 = arith.constant 0 : i32
    %c0_i32_0 = arith.constant 0 : i32
    %c0_i32_1 = arith.constant 0 : i32
    return %c0_i32, %c0_i32_0 : i32, i32
  }
  func.func @transform_8(%arg0: i32) -> (i32, i32) {
    %c0_i32 = arith.constant 0 : i32
    %c0_i32_0 = arith.constant 0 : i32
    %c0_i32_1 = arith.constant 0 : i32
    return %c0_i32, %c0_i32_0 : i32, i32
  }
  func.func @transform_9(%arg0: i32) -> (i32, i32) {
    %c0_i32 = arith.constant 0 : i32
    %c0_i32_0 = arith.constant 0 : i32
    %c0_i32_1 = arith.constant 0 : i32
    return %c0_i32, %c0_i32_0 : i32, i32
  }
  func.func @transform_10(%arg0: i32) -> (i32, i32) {
    %c0_i32 = arith.constant 0 : i32
    %c0_i32_0 = arith.constant 0 : i32
    %c0_i32_1 = arith.constant 0 : i32
    return %c0_i32, %c0_i32_0 : i32, i32
  }
  func.func @transform_11(%arg0: i32) -> (i32, i32) {
    %c0_i32 = arith.constant 0 : i32
    %c0_i32_0 = arith.constant 0 : i32
    %c0_i32_1 = arith.constant 0 : i32
    return %c0_i32, %c0_i32_0 : i32, i32
  }
  func.func @transform_12(%arg0: i32) -> (i32, i32) {
    %c0_i32 = arith.constant 0 : i32
    %c0_i32_0 = arith.constant 0 : i32
    %c0_i32_1 = arith.constant 0 : i32
    return %c0_i32, %c0_i32_0 : i32, i32
  }
}

</mosaic_0001>

<llo_original>
// kernel: encoder_cnn_forward.1
$region0: #{encoder_cnn_forward.1}
  #allocation0 [shape = 'u32[]', space=smem, size = 0x4, offset = 0x4, fixed_abs, tag = 'smem constant byte address 0x4 - core index']
  #allocation1 [shape = 'u32[72,128]{1,0:T(1,128)}', space=vmem, size = 0x9000, scoped, tag = 'internal scratch']
  #allocation2 [shape = 'f32[16,256]{1,0:T(8,128)}', space=vmem, size = 0x4000, scoped, tag = 'scratch operand']
  #allocation3 [shape = 'f32[2,128]{1,0:T(2,128)}', space=vmem, size = 0x400, scoped, tag = 'scratch operand']
  %s0 = inlined_call_operand.vmem [shape: bf16[2,100,128], index: 0, kind: input, shape index: {}]
  %s1 = inlined_call_operand.vmem [shape: f32[100,1], index: 1, kind: input, shape index: {}]
  %s2 = inlined_call_operand.vmem [shape: bf16[128,16], index: 2, kind: input, shape index: {}]
  %s3 = inlined_call_operand.vmem [shape: f32[1,16], index: 3, kind: input, shape index: {}]
  %s4 = inlined_call_operand.vmem [shape: f32[1,16], index: 4, kind: input, shape index: {}]
  %s5 = inlined_call_operand.vmem [shape: bf16[256,128], index: 5, kind: input, shape index: {}]
  %s6 = inlined_call_operand.vmem [shape: f32[1,128], index: 6, kind: input, shape index: {}]
  %s7 = inlined_call_operand.vmem [shape: f32[1,128], index: 7, kind: input, shape index: {}]
  %s8 = inlined_call_operand.vmem [shape: bf16[128,128], index: 8, kind: input, shape index: {}]
  %s9 = inlined_call_operand.vmem [shape: f32[1,128], index: 9, kind: input, shape index: {}]
  %s10 = inlined_call_operand.vmem [shape: f32[1,128], index: 10, kind: input, shape index: {}]
  %s11 = inlined_call_operand.vmem [shape: f32[1,128], index: 11, kind: input, shape index: {}]
  %s12 = inlined_call_operand.hbm [shape: f32[2,128], index: 12, kind: output, shape index: {}]
  %s13 = sld [smem:[#allocation0]]
  $region89: #{encoder_cnn_forward.1} parent=0
    _
  %s15 = ssub.s32 1, %s13
  %s16 = scalar_select 0, %s15, %s13
  $region1: #{encoder_cnn_forward.1} parent=0
    #allocation4 [shape = 'u8[1024]{0}', space=vmem, size = 0x400, scoped, tag = 'output window, operand 0, single buffered']
    #allocation5 [shape = 's32[2]{0}', space=sflag, size = 0x8, scoped, tag = 'scoped memory for encoder_cnn_forward.1']
    %17 = vsyncpa [#allocation5], 0
    loop: start=0, step=1, limit=4
    $region2: #{encoder_cnn_forward.1} parent=1 // loop_pre_header
      _
    $region3: #{encoder_cnn_forward.1} parent=1 // loop_header
      %s19 = sphi 0, %s23
      %p20 = scmp.ge.s32.totalorder %s19, 4
      %s29 = sphi 0, %s31
      %s32 = sphi 0, %s29
      %s33 = sphi 0, %s32
      %s49 = sphi 0, %s33
      %s53 = sphi 0, %s53
      %s55 = sphi 0, %s53
      %s56 = sphi 0, %s55
      %s70 = sphi 0, %s56
      %s74 = sphi 0, %s74
      %s76 = sphi 0, %s74
      %s77 = sphi 0, %s76
      %s91 = sphi 0, %s77
      %s95 = sphi 0, %s95
      %s97 = sphi 0, %s95
      %s98 = sphi 0, %s97
      %s112 = sphi 0, %s98
      %s116 = sphi 0, %s116
      %s118 = sphi 0, %s116
      %s119 = sphi 0, %s118
      %s133 = sphi 0, %s119
      %s137 = sphi 0, %s137
      %s139 = sphi 0, %s137
      %s140 = sphi 0, %s139
      %s154 = sphi 0, %s140
      %s158 = sphi 0, %s158
      %s160 = sphi 0, %s158
      %s161 = sphi 0, %s160
      %s175 = sphi 0, %s161
      %s179 = sphi 0, %s179
      %s181 = sphi 0, %s179
      %s182 = sphi 0, %s181
      %s196 = sphi 0, %s182
      %s200 = sphi 0, %s200
      %s202 = sphi 0, %s200
      %s203 = sphi 0, %s202
      %s217 = sphi 0, %s203
      %s221 = sphi 0, %s221
      %s223 = sphi 0, %s221
      %s224 = sphi 0, %s223
      %s238 = sphi 0, %s224
      %s242 = sphi 0, %s242
      %s244 = sphi 0, %s242
      %s245 = sphi 0, %s244
      %s259 = sphi 0, %s245
      %s263 = sphi 0, %s263
      %s265 = sphi 0, %s263
      %s266 = sphi 0, %s265
      %s280 = sphi 0, %s266
      %s284 = sphi 0, %s284
      %s286 = sphi 0, %s284
      %s287 = sphi 0, %s286
      %s301 = sphi 0, %s287
    $region4: #{encoder_cnn_forward.1} parent=1 // loop_header_branch
      %22 = sbr.rel (%p20) target = $region8
    $region5: #{encoder_cnn_forward.1} parent=1 // loop_body
      %s24 = ssub.s32 %s19, 1
      %s25 = ssub.s32 %s19, 2
      %s26 = sadd.s32 %s19, 1
      %s27 = ssub.s32 %s19, %s26
      %p28 = scmp.eq.s32.totalorder %s27, 0
      %s30 = sadd.s32 %s29, 1
      %s31 = scalar_select %p28, %s29, %s30
      %p34 = pneg %p28
      %p35 = scmp.eq.s32.totalorder %s19, 1
      %p36 = por %p34, %p35
      %p37 = scmp.ne.s32.totalorder %s29, %s32
      %p38 = scmp.eq.s32.totalorder %s19, 0
      %p39 = por %p37, %p38
      %p40 = scmp.ne.s32.totalorder %s29, %s32
      %p41 = scmp.eq.s32.totalorder %s24, 1
      %p42 = por %p40, %p41
      %p43 = scmp.ne.s32.totalorder %s32, %s33
      %p44 = scmp.eq.s32.totalorder %s24, 0
      %p45 = por %p43, %p44
      %p46 = scmp.ne.s32.totalorder %s32, %s33
      %p47 = scmp.eq.s32.totalorder %s25, 1
      %p48 = por %p46, %p47
      %p50 = scmp.ne.s32.totalorder %s33, %s49
      %p51 = scmp.eq.s32.totalorder %s25, 0
      %p52 = por %p50, %p51
      %s54 = sadd.s32 %s53, 1
      %p57 = scmp.eq.s32.totalorder %s19, 1
      %p58 = scmp.ne.s32.totalorder %s53, %s55
      %p59 = scmp.eq.s32.totalorder %s19, 0
      %p60 = por %p58, %p59
      %p61 = scmp.ne.s32.totalorder %s53, %s55
      %p62 = scmp.eq.s32.totalorder %s24, 1
      %p63 = por %p61, %p62
      %p64 = scmp.ne.s32.totalorder %s55, %s56
      %p65 = scmp.eq.s32.totalorder %s24, 0
      %p66 = por %p64, %p65
      %p67 = scmp.ne.s32.totalorder %s55, %s56
      %p68 = scmp.eq.s32.totalorder %s25, 1
      %p69 = por %p67, %p68
      %p71 = scmp.ne.s32.totalorder %s56, %s70
      %p72 = scmp.eq.s32.totalorder %s25, 0
      %p73 = por %p71, %p72
      %s75 = sadd.s32 %s74, 1
      %p78 = scmp.eq.s32.totalorder %s19, 1
      %p79 = scmp.ne.s32.totalorder %s74, %s76
      %p80 = scmp.eq.s32.totalorder %s19, 0
      %p81 = por %p79, %p80
      %p82 = scmp.ne.s32.totalorder %s74, %s76
      %p83 = scmp.eq.s32.totalorder %s24, 1
      %p84 = por %p82, %p83
      %p85 = scmp.ne.s32.totalorder %s76, %s77
      %p86 = scmp.eq.s32.totalorder %s24, 0
      %p87 = por %p85, %p86
      %p88 = scmp.ne.s32.totalorder %s76, %s77
      %p89 = scmp.eq.s32.totalorder %s25, 1
      %p90 = por %p88, %p89
      %p92 = scmp.ne.s32.totalorder %s77, %s91
      %p93 = scmp.eq.s32.totalorder %s25, 0
      %p94 = por %p92, %p93
      %s96 = sadd.s32 %s95, 1
      %p99 = scmp.eq.s32.totalorder %s19, 1
      %p100 = scmp.ne.s32.totalorder %s95, %s97
      %p101 = scmp.eq.s32.totalorder %s19, 0
      %p102 = por %p100, %p101
      %p103 = scmp.ne.s32.totalorder %s95, %s97
      %p104 = scmp.eq.s32.totalorder %s24, 1
      %p105 = por %p103, %p104
      %p106 = scmp.ne.s32.totalorder %s97, %s98
      %p107 = scmp.eq.s32.totalorder %s24, 0
      %p108 = por %p106, %p107
      %p109 = scmp.ne.s32.totalorder %s97, %s98
      %p110 = scmp.eq.s32.totalorder %s25, 1
      %p111 = por %p109, %p110
      %p113 = scmp.ne.s32.totalorder %s98, %s112
      %p114 = scmp.eq.s32.totalorder %s25, 0
      %p115 = por %p113, %p114
      %s117 = sadd.s32 %s116, 1
      %p120 = scmp.eq.s32.totalorder %s19, 1
      %p121 = scmp.ne.s32.totalorder %s116, %s118
      %p122 = scmp.eq.s32.totalorder %s19, 0
      %p123 = por %p121, %p122
      %p124 = scmp.ne.s32.totalorder %s116, %s118
      %p125 = scmp.eq.s32.totalorder %s24, 1
      %p126 = por %p124, %p125
      %p127 = scmp.ne.s32.totalorder %s118, %s119
      %p128 = scmp.eq.s32.totalorder %s24, 0
      %p129 = por %p127, %p128
      %p130 = scmp.ne.s32.totalorder %s118, %s119
      %p131 = scmp.eq.s32.totalorder %s25, 1
      %p132 = por %p130, %p131
      %p134 = scmp.ne.s32.totalorder %s119, %s133
      %p135 = scmp.eq.s32.totalorder %s25, 0
      %p136 = por %p134, %p135
      %s138 = sadd.s32 %s137, 1
      %p141 = scmp.eq.s32.totalorder %s19, 1
      %p142 = scmp.ne.s32.totalorder %s137, %s139
      %p143 = scmp.eq.s32.totalorder %s19, 0
      %p144 = por %p142, %p143
      %p145 = scmp.ne.s32.totalorder %s137, %s139
      %p146 = scmp.eq.s32.totalorder %s24, 1
      %p147 = por %p145, %p146
      %p148 = scmp.ne.s32.totalorder %s139, %s140
      %p149 = scmp.eq.s32.totalorder %s24, 0
      %p150 = por %p148, %p149
      %p151 = scmp.ne.s32.totalorder %s139, %s140
      %p152 = scmp.eq.s32.totalorder %s25, 1
      %p153 = por %p151, %p152
      %p155 = scmp.ne.s32.totalorder %s140, %s154
      %p156 = scmp.eq.s32.totalorder %s25, 0
      %p157 = por %p155, %p156
      %s159 = sadd.s32 %s158, 1
      %p162 = scmp.eq.s32.totalorder %s19, 1
      %p163 = scmp.ne.s32.totalorder %s158, %s160
      %p164 = scmp.eq.s32.totalorder %s19, 0
      %p165 = por %p163, %p164
      %p166 = scmp.ne.s32.totalorder %s158, %s160
      %p167 = scmp.eq.s32.totalorder %s24, 1
      %p168 = por %p166, %p167
      %p169 = scmp.ne.s32.totalorder %s160, %s161
      %p170 = scmp.eq.s32.totalorder %s24, 0
      %p171 = por %p169, %p170
      %p172 = scmp.ne.s32.totalorder %s160, %s161
      %p173 = scmp.eq.s32.totalorder %s25, 1
      %p174 = por %p172, %p173
      %p176 = scmp.ne.s32.totalorder %s161, %s175
      %p177 = scmp.eq.s32.totalorder %s25, 0
      %p178 = por %p176, %p177
      %s180 = sadd.s32 %s179, 1
      %p183 = scmp.eq.s32.totalorder %s19, 1
      %p184 = scmp.ne.s32.totalorder %s179, %s181
      %p185 = scmp.eq.s32.totalorder %s19, 0
      %p186 = por %p184, %p185
      %p187 = scmp.ne.s32.totalorder %s179, %s181
      %p188 = scmp.eq.s32.totalorder %s24, 1
      %p189 = por %p187, %p188
      %p190 = scmp.ne.s32.totalorder %s181, %s182
      %p191 = scmp.eq.s32.totalorder %s24, 0
      %p192 = por %p190, %p191
      %p193 = scmp.ne.s32.totalorder %s181, %s182
      %p194 = scmp.eq.s32.totalorder %s25, 1
      %p195 = por %p193, %p194
      %p197 = scmp.ne.s32.totalorder %s182, %s196
      %p198 = scmp.eq.s32.totalorder %s25, 0
      %p199 = por %p197, %p198
      %s201 = sadd.s32 %s200, 1
      %p204 = scmp.eq.s32.totalorder %s19, 1
      %p205 = scmp.ne.s32.totalorder %s200, %s202
      %p206 = scmp.eq.s32.totalorder %s19, 0
      %p207 = por %p205, %p206
      %p208 = scmp.ne.s32.totalorder %s200, %s202
      %p209 = scmp.eq.s32.totalorder %s24, 1
      %p210 = por %p208, %p209
      %p211 = scmp.ne.s32.totalorder %s202, %s203
      %p212 = scmp.eq.s32.totalorder %s24, 0
      %p213 = por %p211, %p212
      %p214 = scmp.ne.s32.totalorder %s202, %s203
      %p215 = scmp.eq.s32.totalorder %s25, 1
      %p216 = por %p214, %p215
      %p218 = scmp.ne.s32.totalorder %s203, %s217
      %p219 = scmp.eq.s32.totalorder %s25, 0
      %p220 = por %p218, %p219
      %s222 = sadd.s32 %s221, 1
      %p225 = scmp.eq.s32.totalorder %s19, 1
      %p226 = scmp.ne.s32.totalorder %s221, %s223
      %p227 = scmp.eq.s32.totalorder %s19, 0
      %p228 = por %p226, %p227
      %p229 = scmp.ne.s32.totalorder %s221, %s223
      %p230 = scmp.eq.s32.totalorder %s24, 1
      %p231 = por %p229, %p230
      %p232 = scmp.ne.s32.totalorder %s223, %s224
      %p233 = scmp.eq.s32.totalorder %s24, 0
      %p234 = por %p232, %p233
      %p235 = scmp.ne.s32.totalorder %s223, %s224
      %p236 = scmp.eq.s32.totalorder %s25, 1
      %p237 = por %p235, %p236
      %p239 = scmp.ne.s32.totalorder %s224, %s238
      %p240 = scmp.eq.s32.totalorder %s25, 0
      %p241 = por %p239, %p240
      %s243 = sadd.s32 %s242, 1
      %p246 = scmp.eq.s32.totalorder %s19, 1
      %p247 = scmp.ne.s32.totalorder %s242, %s244
      %p248 = scmp.eq.s32.totalorder %s19, 0
      %p249 = por %p247, %p248
      %p250 = scmp.ne.s32.totalorder %s242, %s244
      %p251 = scmp.eq.s32.totalorder %s24, 1
      %p252 = por %p250, %p251
      %p253 = scmp.ne.s32.totalorder %s244, %s245
      %p254 = scmp.eq.s32.totalorder %s24, 0
      %p255 = por %p253, %p254
      %p256 = scmp.ne.s32.totalorder %s244, %s245
      %p257 = scmp.eq.s32.totalorder %s25, 1
      %p258 = por %p256, %p257
      %p260 = scmp.ne.s32.totalorder %s245, %s259
      %p261 = scmp.eq.s32.totalorder %s25, 0
      %p262 = por %p260, %p261
      %s264 = sadd.s32 %s263, 1
      %p267 = scmp.eq.s32.totalorder %s19, 1
      %p268 = scmp.ne.s32.totalorder %s263, %s265
      %p269 = scmp.eq.s32.totalorder %s19, 0
      %p270 = por %p268, %p269
      %p271 = scmp.ne.s32.totalorder %s263, %s265
      %p272 = scmp.eq.s32.totalorder %s24, 1
      %p273 = por %p271, %p272
      %p274 = scmp.ne.s32.totalorder %s265, %s266
      %p275 = scmp.eq.s32.totalorder %s24, 0
      %p276 = por %p274, %p275
      %p277 = scmp.ne.s32.totalorder %s265, %s266
      %p278 = scmp.eq.s32.totalorder %s25, 1
      %p279 = por %p277, %p278
      %p281 = scmp.ne.s32.totalorder %s266, %s280
      %p282 = scmp.eq.s32.totalorder %s25, 0
      %p283 = por %p281, %p282
      %s285 = sadd.s32 %s284, 1
      %p288 = scmp.eq.s32.totalorder %s19, 1
      %p289 = scmp.ne.s32.totalorder %s284, %s286
      %p290 = scmp.eq.s32.totalorder %s19, 0
      %p291 = por %p289, %p290
      %p292 = scmp.ne.s32.totalorder %s284, %s286
      %p293 = scmp.eq.s32.totalorder %s24, 1
      %p294 = por %p292, %p293
      %p295 = scmp.ne.s32.totalorder %s286, %s287
      %p296 = scmp.eq.s32.totalorder %s24, 0
      %p297 = por %p295, %p296
      %p298 = scmp.ne.s32.totalorder %s286, %s287
      %p299 = scmp.eq.s32.totalorder %s25, 1
      %p300 = por %p298, %p299
      %p302 = scmp.ne.s32.totalorder %s287, %s301
      %p303 = scmp.eq.s32.totalorder %s25, 0
      %p304 = por %p302, %p303
      %p305 = scmp.le.s32.totalorder 1, %s19
      %p306 = scmp.lt.s32.totalorder %s19, 3
      %p307 = pnand %p305, %p306
      %p308 = pneg %p307
      // Predicated region
      $region9: #{encoder_cnn_forward.1} parent=5 // pred_check
        _
      $region10: #{encoder_cnn_forward.1} parent=5 // pred_check_branch
        %310 = sbr.rel (%p307) target = $region12
      $region11: #{encoder_cnn_forward.1} parent=5 // pred_region
        %s311 = ssub.s32 %s19, 1
        // Predicated region
        $region13: #{encoder_cnn_forward.1} parent=11 // pred_check
          %p312 = pneg %p66
        $region14: #{encoder_cnn_forward.1} parent=11 // pred_check_branch
          %314 = sbr.rel (%p312) target = $region16
        $region15: #{encoder_cnn_forward.1} parent=11 // pred_region
          _
        $region16: #{encoder_cnn_forward.1} parent=11 // pred_fallthru
          _
        // Predicated region
        $region17: #{encoder_cnn_forward.1} parent=11 // pred_check
          %p315 = pneg %p87
        $region18: #{encoder_cnn_forward.1} parent=11 // pred_check_branch
          %317 = sbr.rel (%p315) target = $region20
        $region19: #{encoder_cnn_forward.1} parent=11 // pred_region
          _
        $region20: #{encoder_cnn_forward.1} parent=11 // pred_fallthru
          _
        // Predicated region
        $region21: #{encoder_cnn_forward.1} parent=11 // pred_check
          %p318 = pneg %p108
        $region22: #{encoder_cnn_forward.1} parent=11 // pred_check_branch
          %320 = sbr.rel (%p318) target = $region24
        $region23: #{encoder_cnn_forward.1} parent=11 // pred_region
          _
        $region24: #{encoder_cnn_forward.1} parent=11 // pred_fallthru
          _
        // Predicated region
        $region25: #{encoder_cnn_forward.1} parent=11 // pred_check
          %p321 = pneg %p129
        $region26: #{encoder_cnn_forward.1} parent=11 // pred_check_branch
          %323 = sbr.rel (%p321) target = $region28
        $region27: #{encoder_cnn_forward.1} parent=11 // pred_region
          _
        $region28: #{encoder_cnn_forward.1} parent=11 // pred_fallthru
          _
        // Predicated region
        $region29: #{encoder_cnn_forward.1} parent=11 // pred_check
          %p324 = pneg %p150
        $region30: #{encoder_cnn_forward.1} parent=11 // pred_check_branch
          %326 = sbr.rel (%p324) target = $region32
        $region31: #{encoder_cnn_forward.1} parent=11 // pred_region
          _
        $region32: #{encoder_cnn_forward.1} parent=11 // pred_fallthru
          _
        // Predicated region
        $region33: #{encoder_cnn_forward.1} parent=11 // pred_check
          %p327 = pneg %p171
        $region34: #{encoder_cnn_forward.1} parent=11 // pred_check_branch
          %329 = sbr.rel (%p327) target = $region36
        $region35: #{encoder_cnn_forward.1} parent=11 // pred_region
          _
        $region36: #{encoder_cnn_forward.1} parent=11 // pred_fallthru
          _
        // Predicated region
        $region37: #{encoder_cnn_forward.1} parent=11 // pred_check
          %p330 = pneg %p192
        $region38: #{encoder_cnn_forward.1} parent=11 // pred_check_branch
          %332 = sbr.rel (%p330) target = $region40
        $region39: #{encoder_cnn_forward.1} parent=11 // pred_region
          _
        $region40: #{encoder_cnn_forward.1} parent=11 // pred_fallthru
          _
        // Predicated region
        $region41: #{encoder_cnn_forward.1} parent=11 // pred_check
          %p333 = pneg %p213
        $region42: #{encoder_cnn_forward.1} parent=11 // pred_check_branch
          %335 = sbr.rel (%p333) target = $region44
        $region43: #{encoder_cnn_forward.1} parent=11 // pred_region
          _
        $region44: #{encoder_cnn_forward.1} parent=11 // pred_fallthru
          _
        // Predicated region
        $region45: #{encoder_cnn_forward.1} parent=11 // pred_check
          %p336 = pneg %p234
        $region46: #{encoder_cnn_forward.1} parent=11 // pred_check_branch
          %338 = sbr.rel (%p336) target = $region48
        $region47: #{encoder_cnn_forward.1} parent=11 // pred_region
          _
        $region48: #{encoder_cnn_forward.1} parent=11 // pred_fallthru
          _
        // Predicated region
        $region49: #{encoder_cnn_forward.1} parent=11 // pred_check
          %p339 = pneg %p255
        $region50: #{encoder_cnn_forward.1} parent=11 // pred_check_branch
          %341 = sbr.rel (%p339) target = $region52
        $region51: #{encoder_cnn_forward.1} parent=11 // pred_region
          _
        $region52: #{encoder_cnn_forward.1} parent=11 // pred_fallthru
          _
        // Predicated region
        $region53: #{encoder_cnn_forward.1} parent=11 // pred_check
          %p342 = pneg %p276
        $region54: #{encoder_cnn_forward.1} parent=11 // pred_check_branch
          %344 = sbr.rel (%p342) target = $region56
        $region55: #{encoder_cnn_forward.1} parent=11 // pred_region
          _
        $region56: #{encoder_cnn_forward.1} parent=11 // pred_fallthru
          _
      $region12: #{encoder_cnn_forward.1} parent=5 // pred_fallthru
        _
      %p345 = scmp.lt.s32.totalorder %s19, 2
      // Predicated region
      $region57: #{encoder_cnn_forward.1} parent=5 // pred_check
        %p346 = pneg %p345
      $region58: #{encoder_cnn_forward.1} parent=5 // pred_check_branch
        %348 = sbr.rel (%p346) target = $region60
      $region59: #{encoder_cnn_forward.1} parent=5 // pred_region
        // Predicated region
        $region61: #{encoder_cnn_forward.1} parent=59 // pred_check
          %p349 = pneg %p39
        $region62: #{encoder_cnn_forward.1} parent=59 // pred_check_branch
          %351 = sbr.rel (%p349) target = $region64
        $region63: #{encoder_cnn_forward.1} parent=59 // pred_region
          %p352 = scmp.lt.s32.totalorder %s19, 1
          %s353 = scalar_select %p352, %s19, 1
          %s354 = smul.addr %s353, 13
          %s355 = smul.addr %s354, 4
          %s356 = scalar_lea.vmem %s0, %s355
        $region64: #{encoder_cnn_forward.1} parent=59 // pred_fallthru
          _
      $region60: #{encoder_cnn_forward.1} parent=5 // pred_fallthru
        _
      %p357 = scmp.le.s32.totalorder 1, %s19
      %p358 = scmp.lt.s32.totalorder %s19, 3
      %p359 = pnand %p357, %p358
      %p360 = pneg %p359
      // Predicated region
      $region65: #{encoder_cnn_forward.1} parent=5 // pred_check
        _
      $region66: #{encoder_cnn_forward.1} parent=5 // pred_check_branch
        %362 = sbr.rel (%p359) target = $region68
      $region67: #{encoder_cnn_forward.1} parent=5 // pred_region
        %s363 = ssub.s32 %s19, 1
        %p364 = scmp.lt.s32.totalorder %s24, 1
        %s365 = scalar_select %p364, %s24, 1
        %s366 = smul.addr %s365, 13
        %s367 = smul.addr %s366, 4
        %s368 = scalar_lea.vmem %s0, %s367
        %p369 = pneg %p45
        %p370 = pneg %p42
        %p371 = pneg %p66
        %p372 = pneg %p63
        %p373 = pneg %p87
        %p374 = pneg %p84
        %p375 = pneg %p108
        %p376 = pneg %p105
        %p377 = pneg %p129
        %p378 = pneg %p126
        %p379 = pneg %p150
        %p380 = pneg %p147
        %p381 = pneg %p171
        %p382 = pneg %p168
        %p383 = pneg %p192
        %p384 = pneg %p189
        %p385 = pneg %p213
        %p386 = pneg %p210
        %p387 = pneg %p234
        %p388 = pneg %p231
        %p389 = pneg %p255
        %p390 = pneg %p252
        %p391 = pneg %p276
        %p392 = pneg %p273
        %p393 = pneg %p297
        %p394 = pneg %p294
        %p395 = scmp.lt.s32.totalorder %s24, 1
        %s396 = scalar_select %p395, %s24, 1
        %s397 = smul.addr %s396, 13
        %s398 = smul.addr %s397, 4
        %s399 = scalar_lea.vmem %s0, %s398
        %p400 = scmp.eq.s32.totalorder %s24, 0
        // Predicated region
        $region69: #{encoder_cnn_forward.1} parent=67 // pred_check
          %p401 = pneg %p400
        $region70: #{encoder_cnn_forward.1} parent=67 // pred_check_branch
          %403 = sbr.rel (%p401) target = $region72
        $region71: #{encoder_cnn_forward.1} parent=67 // pred_region
          %vm404 = vcmask 1047680
          %405 = vst.msk [vmem:[#allocation2 + $0x8] sm:$0xff] %vm404, 0.0
          %406 = vst.msk [vmem:[#allocation2 + $0x18] sm:$0xff] %vm404, 0.0
          %407 = vst [vmem:[#allocation3] sm:$0x3] 0.0
        $region72: #{encoder_cnn_forward.1} parent=67 // pred_fallthru
          _
        %v408 = vld [vmem:[%s399] sm:$0xf]
        %v409 = vld [vmem:[%s399 + $0x4] sm:$0xf]
        %v410 = vld [vmem:[%s399 + $0x8] sm:$0xf]
        %v411 = vld [vmem:[%s399 + $0xc] sm:$0xf]
        %v412 = vld [vmem:[%s399 + $0x10] sm:$0xf]
        %v413 = vld [vmem:[%s399 + $0x14] sm:$0xf]
        %v414 = vld [vmem:[%s399 + $0x18] sm:$0xf]
        %v415 = vld [vmem:[%s399 + $0x1c] sm:$0xf]
        %v416 = vld [vmem:[%s399 + $0x20] sm:$0xf]
        %v417 = vld [vmem:[%s399 + $0x24] sm:$0xf]
        %v418 = vld [vmem:[%s399 + $0x28] sm:$0xf]
        %v419 = vld [vmem:[%s399 + $0x2c] sm:$0xf]
        %v420 = vld [vmem:[%s399 + $0x30] sm:$0x3]
        %v421 = vld [vmem:[%s2] sm:$0xf]
        %v422 = vld [vmem:[%s2 + $0x4] sm:$0xf]
        %v423 = vld [vmem:[%s2 + $0x8] sm:$0xf]
        %v424 = vld [vmem:[%s2 + $0xc] sm:$0xf]
        %v425 = vld [vmem:[%s2 + $0x10] sm:$0xf]
        %v426 = vld [vmem:[%s2 + $0x14] sm:$0xf]
        %v427 = vld [vmem:[%s2 + $0x18] sm:$0xf]
        %v428 = vld [vmem:[%s2 + $0x1c] sm:$0xf]
        %v429 = vld [vmem:[%s2 + $0x20] sm:$0xf]
        %v430 = vld [vmem:[%s2 + $0x24] sm:$0xf]
        %v431 = vld [vmem:[%s2 + $0x28] sm:$0xf]
        %v432 = vld [vmem:[%s2 + $0x2c] sm:$0xf]
        %v433 = vld [vmem:[%s2 + $0x30] sm:$0xf]
        %v434 = vld [vmem:[%s2 + $0x34] sm:$0xf]
        %v435 = vld [vmem:[%s2 + $0x38] sm:$0xf]
        %v436 = vld [vmem:[%s2 + $0x3c] sm:$0xf]
        %v450 = vunpack.c.l.b16 %v408
        %v451 = vunpack.c.l.b16 %v409
        %v452 = vunpack.c.l.b16 %v410
        %v453 = vunpack.c.l.b16 %v411
        %v454 = vunpack.c.l.b16 %v412
        %v455 = vunpack.c.l.b16 %v413
        %v456 = vunpack.c.l.b16 %v414
        %v457 = vunpack.c.l.b16 %v415
        %v458 = vunpack.c.l.b16 %v416
        %v459 = vunpack.c.l.b16 %v417
        %v460 = vunpack.c.l.b16 %v418
        %v461 = vunpack.c.l.b16 %v419
        %v462 = vunpack.c.l.b16 %v420
        %v463 = vpack.c.b16 %v451, %v450
        %v464 = vpack.c.b16 %v453, %v452
        %v465 = vpack.c.b16 %v455, %v454
        %v466 = vpack.c.b16 %v457, %v456
        %v467 = vpack.c.b16 %v459, %v458
        %v468 = vpack.c.b16 %v461, %v460
        %v469 = vpack.c.b16 %v462, %v462
        %v493 = vunpack.c.l.b16 %v421
        %v494 = vunpack.c.l.b16 %v422
        %v495 = vunpack.c.l.b16 %v423
        %v496 = vunpack.c.l.b16 %v424
        %v497 = vunpack.c.l.b16 %v425
        %v498 = vunpack.c.l.b16 %v426
        %v499 = vunpack.c.l.b16 %v427
        %v500 = vunpack.c.l.b16 %v428
        %v501 = vunpack.c.l.b16 %v429
        %v502 = vunpack.c.l.b16 %v430
        %v503 = vunpack.c.l.b16 %v431
        %v504 = vunpack.c.l.b16 %v432
        %v505 = vunpack.c.l.b16 %v433
        %v506 = vunpack.c.l.b16 %v434
        %v507 = vunpack.c.l.b16 %v435
        %v508 = vunpack.c.l.b16 %v436
        %v509 = vpack.c.b16 %v494, %v493
        %v510 = vpack.c.b16 %v496, %v495
        %v511 = vpack.c.b16 %v498, %v497
        %v512 = vpack.c.b16 %v500, %v499
        %v513 = vpack.c.b16 %v502, %v501
        %v514 = vpack.c.b16 %v504, %v503
        %v515 = vpack.c.b16 %v506, %v505
        %v516 = vpack.c.b16 %v508, %v507
        %525 = vmatpush.bf16.msra.mxu0 %v516
        %526 = vmatpush.bf16.msra.mxu0 %v515
        %527 = vmatpush.bf16.msra.mxu0 %v514
        %528 = vmatpush.bf16.msra.mxu0 %v513
        %529 = vmatpush.bf16.msra.mxu0 %v512
        %530 = vmatpush.bf16.msra.mxu0 %v511
        %531 = vmatpush.bf16.msra.mxu0 %v510
        %532 = vmatpush.bf16.msra.mxu0 %v509
        %533 = vmatmul.bf16.gmra.mxu0 %v463
        %v534 = vpop.f32.mrf.mxu0
        %v535 = vadd.f32 0.0, %v534
        %v536 = vpop.f32.mrf.mxu0
        %v537 = vadd.f32 0.0, %v536
        %538 = vmatmul.bf16.gmra.mxu0 %v464
        %v539 = vpop.f32.mrf.mxu0
        %v540 = vadd.f32 0.0, %v539
        %v541 = vpop.f32.mrf.mxu0
        %v542 = vadd.f32 0.0, %v541
        %543 = vmatmul.bf16.gmra.mxu0 %v465
        %v544 = vpop.f32.mrf.mxu0
        %v545 = vadd.f32 0.0, %v544
        %v546 = vpop.f32.mrf.mxu0
        %v547 = vadd.f32 0.0, %v546
        %548 = vmatmul.bf16.gmra.mxu0 %v466
        %v549 = vpop.f32.mrf.mxu0
        %v550 = vadd.f32 0.0, %v549
        %v551 = vpop.f32.mrf.mxu0
        %v552 = vadd.f32 0.0, %v551
        %553 = vmatmul.bf16.gmra.mxu0 %v467
        %v554 = vpop.f32.mrf.mxu0
        %v555 = vadd.f32 0.0, %v554
        %v556 = vpop.f32.mrf.mxu0
        %v557 = vadd.f32 0.0, %v556
        %558 = vmatmul.bf16.gmra.mxu0 %v468
        %v559 = vpop.f32.mrf.mxu0
        %v560 = vadd.f32 0.0, %v559
        %v561 = vpop.f32.mrf.mxu0
        %v562 = vadd.f32 0.0, %v561
        %563 = vmatmul.bf16.gmra.mxu0 %v469
        %v564 = vpop.f32.mrf.mxu0
        %v565 = vpop.f32.mrf.mxu0
        %566 = vdwg.mxu0
        %v567 = vld [vmem:[%s3] sm:$0x1]
        %v569 = vperm.slane %v567, 0
        %v571 = vmul.f32 %v535, %v569
        %v572 = vmul.f32 %v537, %v569
        %v573 = vmul.f32 %v540, %v569
        %v574 = vmul.f32 %v542, %v569
        %v575 = vmul.f32 %v545, %v569
        %v576 = vmul.f32 %v547, %v569
        %v577 = vmul.f32 %v550, %v569
        %v578 = vmul.f32 %v552, %v569
        %v579 = vmul.f32 %v555, %v569
        %v580 = vmul.f32 %v557, %v569
        %v581 = vmul.f32 %v560, %v569
        %v582 = vmul.f32 %v562, %v569
        %v583 = vld [vmem:[%s4] sm:$0x1]
        %v585 = vperm.slane %v583, 0
        %v587 = vadd.f32 %v571, %v585
        %v588 = vadd.f32 %v572, %v585
        %v589 = vadd.f32 %v573, %v585
        %v590 = vadd.f32 %v574, %v585
        %v591 = vadd.f32 %v575, %v585
        %v592 = vadd.f32 %v576, %v585
        %v593 = vadd.f32 %v577, %v585
        %v594 = vadd.f32 %v578, %v585
        %v595 = vadd.f32 %v579, %v585
        %v596 = vadd.f32 %v580, %v585
        %v597 = vadd.f32 %v581, %v585
        %v598 = vadd.f32 %v582, %v585
        %v599 = vmax.f32 %v587, 0.0
        %v600 = vmax.f32 %v588, 0.0
        %v601 = vmax.f32 %v589, 0.0
        %v602 = vmax.f32 %v590, 0.0
        %v603 = vmax.f32 %v591, 0.0
        %v604 = vmax.f32 %v592, 0.0
        %v605 = vmax.f32 %v593, 0.0
        %v606 = vmax.f32 %v594, 0.0
        %v607 = vmax.f32 %v595, 0.0
        %v608 = vmax.f32 %v596, 0.0
        %v609 = vmax.f32 %v597, 0.0
        %v610 = vmax.f32 %v598, 0.0
        %v611 = vld [vmem:[%s1] sm:$0xff]
        %v612 = vld [vmem:[%s1 + $0x8] sm:$0xff]
        %v613 = vld [vmem:[%s1 + $0x10] sm:$0xff]
        %v614 = vld [vmem:[%s1 + $0x18] sm:$0xff]
        %v615 = vld [vmem:[%s1 + $0x20] sm:$0xff]
        %v616 = vld [vmem:[%s1 + $0x28] sm:$0xff]
        %v617 = vld [vmem:[%s1 + $0x30] sm:$0xff]
        %v618 = vld [vmem:[%s1 + $0x38] sm:$0xff]
        %v619 = vld [vmem:[%s1 + $0x40] sm:$0xff]
        %v620 = vld [vmem:[%s1 + $0x48] sm:$0xff]
        %v621 = vld [vmem:[%s1 + $0x50] sm:$0xff]
        %v622 = vld [vmem:[%s1 + $0x58] sm:$0xff]
        %624 = vset.pattern.permute.xlu0 0
        %625 = vperm.xlu0 %624, %v611
        %v626 = vpop.permute.xlu0 %625
        %629 = vset.pattern.permute.xlu0 0
        %630 = vperm.xlu0 %629, %v612
        %v631 = vpop.permute.xlu0 %630
        %634 = vset.pattern.permute.xlu0 0
        %635 = vperm.xlu0 %634, %v613
        %v636 = vpop.permute.xlu0 %635
        %639 = vset.pattern.permute.xlu0 0
        %640 = vperm.xlu0 %639, %v614
        %v641 = vpop.permute.xlu0 %640
        %644 = vset.pattern.permute.xlu0 0
        %645 = vperm.xlu0 %644, %v615
        %v646 = vpop.permute.xlu0 %645
        %649 = vset.pattern.permute.xlu0 0
        %650 = vperm.xlu0 %649, %v616
        %v651 = vpop.permute.xlu0 %650
        %654 = vset.pattern.permute.xlu0 0
        %655 = vperm.xlu0 %654, %v617
        %v656 = vpop.permute.xlu0 %655
        %659 = vset.pattern.permute.xlu0 0
        %660 = vperm.xlu0 %659, %v618
        %v661 = vpop.permute.xlu0 %660
        %664 = vset.pattern.permute.xlu0 0
        %665 = vperm.xlu0 %664, %v619
        %v666 = vpop.permute.xlu0 %665
        %669 = vset.pattern.permute.xlu0 0
        %670 = vperm.xlu0 %669, %v620
        %v671 = vpop.permute.xlu0 %670
        %674 = vset.pattern.permute.xlu0 0
        %675 = vperm.xlu0 %674, %v621
        %v676 = vpop.permute.xlu0 %675
        %679 = vset.pattern.permute.xlu0 0
        %680 = vperm.xlu0 %679, %v622
        %v681 = vpop.permute.xlu0 %680
        %v683 = vmul.f32 %v599, %v626
        %v684 = vmul.f32 %v600, %v631
        %v685 = vmul.f32 %v601, %v636
        %v686 = vmul.f32 %v602, %v641
        %v687 = vmul.f32 %v603, %v646
        %v688 = vmul.f32 %v604, %v651
        %v689 = vmul.f32 %v605, %v656
        %v690 = vmul.f32 %v606, %v661
        %v691 = vmul.f32 %v607, %v666
        %v692 = vmul.f32 %v608, %v671
        %v693 = vmul.f32 %v609, %v676
        %v694 = vmul.f32 %v610, %v681
        %vm695 = vcmask 125952
        %696 = vst.msk [vmem:[#allocation2] sm:$0xf] %vm695, %v683
        %vm699 = vcmask 1046528
        %v700 = vrot.slane %v683, 1
        %v701 = vrot.slane %v684, 1
        %v702 = vsel %vm699, %v700, %v701
        %vm704 = vcmask 130052
        %705 = vst.msk [vmem:[#allocation2] sm:$0xf0] %vm704, %v702
        %v706 = vrot.slane %v684, 2
        %708 = vst.msk [vmem:[#allocation2 + $0x10] sm:$0xf] %vm695, %v706
        %vm710 = vcmask 1044480
        %v711 = vrot.slane %v684, 3
        %v712 = vrot.slane %v685, 3
        %v713 = vsel %vm710, %v711, %v712
        %715 = vst.msk [vmem:[#allocation2 + $0x10] sm:$0xf0] %vm704, %v713
        %v717 = vrot.slane %v686, 1
        %718 = vrot.lane.b32.xlu0 %v717, 16
        %v719 = vpop.permute.xlu0 %718
        %vm721 = vcmask 257152
        %722 = vst.msk [vmem:[#allocation2] sm:$0xf] %vm721, %v719
        %vm724 = vcmask 1045504
        %v725 = vrot.slane %v686, 2
        %v726 = vrot.slane %v687, 2
        %v727 = vsel %vm724, %v725, %v726
        %728 = vrot.lane.b32.xlu0 %v727, 16
        %v729 = vpop.permute.xlu0 %728
        %vm731 = vcmask 261252
        %732 = vst.msk [vmem:[#allocation2] sm:$0xf0] %vm731, %v729
        %v733 = vrot.slane %v687, 3
        %734 = vrot.lane.b32.xlu0 %v733, 16
        %v735 = vpop.permute.xlu0 %734
        %737 = vst.msk [vmem:[#allocation2 + $0x10] sm:$0xf] %vm721, %v735
        %v739 = vrot.slane %v688, 4
        %740 = vrot.lane.b32.xlu0 %v739, 16
        %v741 = vpop.permute.xlu0 %740
        %743 = vst.msk [vmem:[#allocation2 + $0x10] sm:$0xf0] %vm731, %v741
        %744 = vrot.lane.b32.xlu0 %v700, 32
        %v745 = vpop.permute.xlu0 %744
        %vm747 = vcmask 388352
        %748 = vst.msk [vmem:[#allocation2] sm:$0xf] %vm747, %v745
        %v749 = vrot.slane %v683, 2
        %v750 = vsel %vm724, %v749, %v706
        %751 = vrot.lane.b32.xlu0 %v750, 32
        %v752 = vpop.permute.xlu0 %751
        %vm754 = vcmask 392452
        %755 = vst.msk [vmem:[#allocation2] sm:$0xf0] %vm754, %v752
        %756 = vrot.lane.b32.xlu0 %v711, 32
        %v757 = vpop.permute.xlu0 %756
        %759 = vst.msk [vmem:[#allocation2 + $0x10] sm:$0xf] %vm747, %v757
        %v760 = vrot.slane %v685, 4
        %761 = vrot.lane.b32.xlu0 %v760, 32
        %v762 = vpop.permute.xlu0 %761
        %764 = vst.msk [vmem:[#allocation2 + $0x10] sm:$0xf0] %vm754, %v762
        %v766 = vrot.slane %v689, 2
        %767 = vrot.lane.b32.xlu0 %v766, 48
        %v768 = vpop.permute.xlu0 %767
        %vm770 = vcmask 519552
        %771 = vst.msk [vmem:[#allocation2] sm:$0xf] %vm770, %v768
        %v773 = vrot.slane %v689, 3
        %v774 = vrot.slane %v690, 3
        %v775 = vsel %vm710, %v773, %v774
        %776 = vrot.lane.b32.xlu0 %v775, 48
        %v777 = vpop.permute.xlu0 %776
        %vm779 = vcmask 523652
        %780 = vst.msk [vmem:[#allocation2] sm:$0xf0] %vm779, %v777
        %v781 = vrot.slane %v690, 4
        %782 = vrot.lane.b32.xlu0 %v781, 48
        %v783 = vpop.permute.xlu0 %782
        %785 = vst.msk [vmem:[#allocation2 + $0x10] sm:$0xf] %vm770, %v783
        %v787 = vrot.slane %v691, 5
        %788 = vrot.lane.b32.xlu0 %v787, 48
        %v789 = vpop.permute.xlu0 %788
        %791 = vst.msk [vmem:[#allocation2 + $0x10] sm:$0xf0] %vm779, %v789
        %v793 = vrot.slane %v692, 3
        %794 = vrot.lane.b32.xlu0 %v793, 64
        %v795 = vpop.permute.xlu0 %794
        %vm797 = vcmask 650752
        %798 = vst.msk [vmem:[#allocation2] sm:$0xf] %vm797, %v795
        %v800 = vrot.slane %v693, 4
        %801 = vrot.lane.b32.xlu0 %v800, 64
        %v802 = vpop.permute.xlu0 %801
        %vm804 = vcmask 654852
        %805 = vst.msk [vmem:[#allocation2] sm:$0xf0] %vm804, %v802
        %vm807 = vcmask 1042432
        %v808 = vrot.slane %v693, 5
        %v809 = vrot.slane %v694, 5
        %v810 = vsel %vm807, %v808, %v809
        %811 = vrot.lane.b32.xlu0 %v810, 64
        %v812 = vpop.permute.xlu0 %811
        %814 = vst.msk [vmem:[#allocation2 + $0x10] sm:$0xf] %vm797, %v812
        %v815 = vrot.slane %v694, 6
        %816 = vrot.lane.b32.xlu0 %v815, 64
        %v817 = vpop.permute.xlu0 %816
        %819 = vst.msk [vmem:[#allocation2 + $0x10] sm:$0xf0] %vm804, %v817
        %820 = vrot.lane.b32.xlu0 %v773, 80
        %v821 = vpop.permute.xlu0 %820
        %vm823 = vcmask 781952
        %824 = vst.msk [vmem:[#allocation2] sm:$0xf] %vm823, %v821
        %825 = vrot.lane.b32.xlu0 %v781, 80
        %v826 = vpop.permute.xlu0 %825
        %vm828 = vcmask 786052
        %829 = vst.msk [vmem:[#allocation2] sm:$0xf0] %vm828, %v826
        %v830 = vrot.slane %v690, 5
        %v831 = vsel %vm807, %v830, %v787
        %832 = vrot.lane.b32.xlu0 %v831, 80
        %v833 = vpop.permute.xlu0 %832
        %835 = vst.msk [vmem:[#allocation2 + $0x10] sm:$0xf] %vm823, %v833
        %v836 = vrot.slane %v691, 6
        %837 = vrot.lane.b32.xlu0 %v836, 80
        %v838 = vpop.permute.xlu0 %837
        %840 = vst.msk [vmem:[#allocation2 + $0x10] sm:$0xf0] %vm828, %v838
        %v841 = vrot.slane %v683, 5
        %v842 = vrot.slane %v684, 5
        %v843 = vsel %vm807, %v841, %v842
        %844 = vrot.lane.b32.xlu0 %v843, 96
        %v845 = vpop.permute.xlu0 %844
        %vm847 = vcmask 913152
        %848 = vst.msk [vmem:[#allocation2] sm:$0xf] %vm847, %v845
        %v849 = vrot.slane %v684, 6
        %850 = vrot.lane.b32.xlu0 %v849, 96
        %v851 = vpop.permute.xlu0 %850
        %vm853 = vcmask 917252
        %854 = vst.msk [vmem:[#allocation2] sm:$0xf0] %vm853, %v851
        %vm855 = vcmask 1040384
        %v856 = vrot.slane %v684, 7
        %v857 = vrot.slane %v685, 7
        %v858 = vsel %vm855, %v856, %v857
        %859 = vrot.lane.b32.xlu0 %v858, 96
        %v860 = vpop.permute.xlu0 %859
        %862 = vst.msk [vmem:[#allocation2 + $0x10] sm:$0xf] %vm847, %v860
        %863 = vrot.lane.b32.xlu0 %v685, 96
        %v864 = vpop.permute.xlu0 %863
        %866 = vst.msk [vmem:[#allocation2 + $0x10] sm:$0xf0] %vm853, %v864
        %vm867 = vcmask 1041408
        %v868 = vrot.slane %v686, 6
        %v869 = vrot.slane %v687, 6
        %v870 = vsel %vm867, %v868, %v869
        %871 = vrot.lane.b32.xlu0 %v870, 112
        %v872 = vpop.permute.xlu0 %871
        %vm874 = vcmask 1044352
        %875 = vst.msk [vmem:[#allocation2] sm:$0xf] %vm874, %v872
        %v876 = vrot.slane %v687, 7
        %877 = vrot.lane.b32.xlu0 %v876, 112
        %v878 = vpop.permute.xlu0 %877
        %vm880 = vcmask 1048452
        %881 = vst.msk [vmem:[#allocation2] sm:$0xf0] %vm880, %v878
        %882 = vrot.lane.b32.xlu0 %v688, 112
        %v883 = vpop.permute.xlu0 %882
        %885 = vst.msk [vmem:[#allocation2 + $0x10] sm:$0xf] %vm874, %v883
        %v886 = vrot.slane %v688, 1
        %v887 = vrot.slane %v689, 1
        %v888 = vsel %vm699, %v886, %v887
        %889 = vrot.lane.b32.xlu0 %v888, 112
        %v890 = vpop.permute.xlu0 %889
        %892 = vst.msk [vmem:[#allocation2 + $0x10] sm:$0xf0] %vm880, %v890
        %v893 = vrot.slane %v683, 6
        %v894 = vsel %vm867, %v893, %v849
        %896 = vst.msk [vmem:[#allocation2 + $0x8] sm:$0xf] %vm695, %v894
        %898 = vst.msk [vmem:[#allocation2 + $0x8] sm:$0xf0] %vm704, %v856
        %899 = vst.msk [vmem:[#allocation2 + $0x18] sm:$0xf] %vm695, %v685
        %v900 = vrot.slane %v685, 1
        %v901 = vsel %vm699, %v900, %v717
        %903 = vst.msk [vmem:[#allocation2 + $0x18] sm:$0xf0] %vm704, %v901
        %v904 = vld [vmem:[#allocation2] sm:$0xff]
        %v905 = vld [vmem:[#allocation2 + $0x8] sm:$0xff]
        %v906 = vld [vmem:[#allocation2 + $0x10] sm:$0xff]
        %v907 = vld [vmem:[#allocation2 + $0x18] sm:$0xff]
        %v908 = vpack.c.bf16 %v906, %v904
        %v909 = vpack.c.bf16 %v907, %v905
        %v910 = vld [vmem:[%s5] sm:$0xf]
        %v911 = vld [vmem:[%s5 + $0x4] sm:$0xf]
        %v912 = vld [vmem:[%s5 + $0x8] sm:$0xf]
        %v913 = vld [vmem:[%s5 + $0xc] sm:$0xf]
        %v914 = vld [vmem:[%s5 + $0x10] sm:$0xf]
        %v915 = vld [vmem:[%s5 + $0x14] sm:$0xf]
        %v916 = vld [vmem:[%s5 + $0x18] sm:$0xf]
        %v917 = vld [vmem:[%s5 + $0x1c] sm:$0xf]
        %v918 = vld [vmem:[%s5 + $0x20] sm:$0xf]
        %v919 = vld [vmem:[%s5 + $0x24] sm:$0xf]
        %v920 = vld [vmem:[%s5 + $0x28] sm:$0xf]
        %v921 = vld [vmem:[%s5 + $0x2c] sm:$0xf]
        %v922 = vld [vmem:[%s5 + $0x30] sm:$0xf]
        %v923 = vld [vmem:[%s5 + $0x34] sm:$0xf]
        %v924 = vld [vmem:[%s5 + $0x38] sm:$0xf]
        %v925 = vld [vmem:[%s5 + $0x3c] sm:$0xf]
        %v926 = vld [vmem:[%s5 + $0x40] sm:$0xf]
        %v927 = vld [vmem:[%s5 + $0x44] sm:$0xf]
        %v928 = vld [vmem:[%s5 + $0x48] sm:$0xf]
        %v929 = vld [vmem:[%s5 + $0x4c] sm:$0xf]
        %v930 = vld [vmem:[%s5 + $0x50] sm:$0xf]
        %v931 = vld [vmem:[%s5 + $0x54] sm:$0xf]
        %v932 = vld [vmem:[%s5 + $0x58] sm:$0xf]
        %v933 = vld [vmem:[%s5 + $0x5c] sm:$0xf]
        %v934 = vld [vmem:[%s5 + $0x60] sm:$0xf]
        %v935 = vld [vmem:[%s5 + $0x64] sm:$0xf]
        %v936 = vld [vmem:[%s5 + $0x68] sm:$0xf]
        %v937 = vld [vmem:[%s5 + $0x6c] sm:$0xf]
        %v938 = vld [vmem:[%s5 + $0x70] sm:$0xf]
        %v939 = vld [vmem:[%s5 + $0x74] sm:$0xf]
        %v940 = vld [vmem:[%s5 + $0x78] sm:$0xf]
        %v941 = vld [vmem:[%s5 + $0x7c] sm:$0xf]
        %v974 = vunpack.c.l.b16 %v910
        %v975 = vunpack.c.l.b16 %v911
        %v976 = vunpack.c.l.b16 %v912
        %v977 = vunpack.c.l.b16 %v913
        %v978 = vunpack.c.l.b16 %v914
        %v979 = vunpack.c.l.b16 %v915
        %v980 = vunpack.c.l.b16 %v916
        %v981 = vunpack.c.l.b16 %v917
        %v982 = vunpack.c.l.b16 %v918
        %v983 = vunpack.c.l.b16 %v919
        %v984 = vunpack.c.l.b16 %v920
        %v985 = vunpack.c.l.b16 %v921
        %v986 = vunpack.c.l.b16 %v922
        %v987 = vunpack.c.l.b16 %v923
        %v988 = vunpack.c.l.b16 %v924
        %v989 = vunpack.c.l.b16 %v925
        %v990 = vunpack.c.l.b16 %v926
        %v991 = vunpack.c.l.b16 %v927
        %v992 = vunpack.c.l.b16 %v928
        %v993 = vunpack.c.l.b16 %v929
        %v994 = vunpack.c.l.b16 %v930
        %v995 = vunpack.c.l.b16 %v931
        %v996 = vunpack.c.l.b16 %v932
        %v997 = vunpack.c.l.b16 %v933
        %v998 = vunpack.c.l.b16 %v934
        %v999 = vunpack.c.l.b16 %v935
        %v1000 = vunpack.c.l.b16 %v936
        %v1001 = vunpack.c.l.b16 %v937
        %v1002 = vunpack.c.l.b16 %v938
        %v1003 = vunpack.c.l.b16 %v939
        %v1004 = vunpack.c.l.b16 %v940
        %v1005 = vunpack.c.l.b16 %v941
        %v1006 = vpack.c.b16 %v975, %v974
        %v1007 = vpack.c.b16 %v977, %v976
        %v1008 = vpack.c.b16 %v979, %v978
        %v1009 = vpack.c.b16 %v981, %v980
        %v1010 = vpack.c.b16 %v983, %v982
        %v1011 = vpack.c.b16 %v985, %v984
        %v1012 = vpack.c.b16 %v987, %v986
        %v1013 = vpack.c.b16 %v989, %v988
        %v1014 = vpack.c.b16 %v991, %v990
        %v1015 = vpack.c.b16 %v993, %v992
        %v1016 = vpack.c.b16 %v995, %v994
        %v1017 = vpack.c.b16 %v997, %v996
        %v1018 = vpack.c.b16 %v999, %v998
        %v1019 = vpack.c.b16 %v1001, %v1000
        %v1020 = vpack.c.b16 %v1003, %v1002
        %v1021 = vpack.c.b16 %v1005, %v1004
        %1038 = vmatpush.bf16.msra.mxu0 %v1013
        %1039 = vmatpush.bf16.msra.mxu0 %v1012
        %1040 = vmatpush.bf16.msra.mxu0 %v1011
        %1041 = vmatpush.bf16.msra.mxu0 %v1010
        %1042 = vmatpush.bf16.msra.mxu0 %v1009
        %1043 = vmatpush.bf16.msra.mxu0 %v1008
        %1044 = vmatpush.bf16.msra.mxu0 %v1007
        %1045 = vmatpush.bf16.msra.mxu0 %v1006
        %1046 = vmatmul.bf16.gmra.mxu0 %v908
        %v1047 = vpop.f32.mrf.mxu0
        %v1048 = vadd.f32 0.0, %v1047
        %v1049 = vpop.f32.mrf.mxu0
        %v1050 = vadd.f32 0.0, %v1049
        %1051 = vdwg.mxu0
        %1052 = vmatpush.bf16.msra.mxu0 %v1021
        %1053 = vmatpush.bf16.msra.mxu0 %v1020
        %1054 = vmatpush.bf16.msra.mxu0 %v1019
        %1055 = vmatpush.bf16.msra.mxu0 %v1018
        %1056 = vmatpush.bf16.msra.mxu0 %v1017
        %1057 = vmatpush.bf16.msra.mxu0 %v1016
        %1058 = vmatpush.bf16.msra.mxu0 %v1015
        %1059 = vmatpush.bf16.msra.mxu0 %v1014
        %1060 = vmatmul.bf16.gmra.mxu0 %v909
        %v1061 = vpop.f32.mrf.mxu0
        %v1062 = vadd.f32 %v1048, %v1061
        %v1063 = vpop.f32.mrf.mxu0
        %v1064 = vadd.f32 %v1050, %v1063
        %1065 = vdwg.mxu0
        %v1066 = vld [vmem:[%s6] sm:$0x1]
        %v1068 = vperm.slane %v1066, 0
        %v1070 = vmul.f32 %v1062, %v1068
        %v1071 = vmul.f32 %v1064, %v1068
        %v1072 = vld [vmem:[%s7] sm:$0x1]
        %v1074 = vperm.slane %v1072, 0
        %v1076 = vadd.f32 %v1070, %v1074
        %v1077 = vadd.f32 %v1071, %v1074
        %v1078 = vmax.f32 %v1076, 0.0
        %v1079 = vmax.f32 %v1077, 0.0
        %v1080 = vadd.f32 %v1078, %v1079
        %v1081 = vrot.slane %v1080, 4
        %v1082 = vadd.f32 %v1080, %v1081
        %v1083 = vrot.slane %v1082, 2
        %v1084 = vadd.f32 %v1082, %v1083
        %v1085 = vrot.slane %v1084, 1
        %v1086 = vadd.f32 %v1084, %v1085
        %v1087 = vrcp.pop 16.0
        %v1088 = vmul.f32 16.0, %v1087
        %v1089 = vsub.f32 1.0, %v1088
        %v1090 = vmul.f32 %v1087, %v1089
        %v1091 = vadd.f32 %v1087, %v1090
        %vm1092 = vweird.f32 %v1087
        %v1093 = vsel %vm1092, %v1087, %v1091
        %v1094 = vmul.f32 %v1086, %v1093
        %v1095 = vlaneseq
        %v1096 = vshrl.u32 %v1095, 7
        %v1097 = vstv %s24
        %vm1098 = vcmp.eq.s32.totalorder %v1096, %v1097
        %v1099 = vld [vmem:[#allocation3] sm:$0x3]
        %v1100 = vsel %vm1098, %v1094, %v1099
        %1101 = vst [vmem:[#allocation3] sm:$0x3] %v1100
        %p1102 = scmp.eq.s32.totalorder %s24, 1
        // Predicated region
        $region73: #{encoder_cnn_forward.1} parent=67 // pred_check
          %p1103 = pneg %p1102
        $region74: #{encoder_cnn_forward.1} parent=67 // pred_check_branch
          %1105 = sbr.rel (%p1103) target = $region76
        $region75: #{encoder_cnn_forward.1} parent=67 // pred_region
          %v1106 = vld [vmem:[#allocation3] sm:$0x3]
          %v1107 = vpack.c.bf16 %v1106, %v1106
          %v1108 = vld [vmem:[%s8] sm:$0xf]
          %v1109 = vld [vmem:[%s8 + $0x4] sm:$0xf]
          %v1110 = vld [vmem:[%s8 + $0x8] sm:$0xf]
          %v1111 = vld [vmem:[%s8 + $0xc] sm:$0xf]
          %v1112 = vld [vmem:[%s8 + $0x10] sm:$0xf]
          %v1113 = vld [vmem:[%s8 + $0x14] sm:$0xf]
          %v1114 = vld [vmem:[%s8 + $0x18] sm:$0xf]
          %v1115 = vld [vmem:[%s8 + $0x1c] sm:$0xf]
          %v1116 = vld [vmem:[%s8 + $0x20] sm:$0xf]
          %v1117 = vld [vmem:[%s8 + $0x24] sm:$0xf]
          %v1118 = vld [vmem:[%s8 + $0x28] sm:$0xf]
          %v1119 = vld [vmem:[%s8 + $0x2c] sm:$0xf]
          %v1120 = vld [vmem:[%s8 + $0x30] sm:$0xf]
          %v1121 = vld [vmem:[%s8 + $0x34] sm:$0xf]
          %v1122 = vld [vmem:[%s8 + $0x38] sm:$0xf]
          %v1123 = vld [vmem:[%s8 + $0x3c] sm:$0xf]
          %v1124 = vld [vmem:[%s9] sm:$0x1]
          %v1126 = vperm.slane %v1124, 0
          %v1144 = vunpack.c.l.b16 %v1108
          %v1145 = vunpack.c.l.b16 %v1109
          %v1146 = vunpack.c.l.b16 %v1110
          %v1147 = vunpack.c.l.b16 %v1111
          %v1148 = vunpack.c.l.b16 %v1112
          %v1149 = vunpack.c.l.b16 %v1113
          %v1150 = vunpack.c.l.b16 %v1114
          %v1151 = vunpack.c.l.b16 %v1115
          %v1152 = vunpack.c.l.b16 %v1116
          %v1153 = vunpack.c.l.b16 %v1117
          %v1154 = vunpack.c.l.b16 %v1118
          %v1155 = vunpack.c.l.b16 %v1119
          %v1156 = vunpack.c.l.b16 %v1120
          %v1157 = vunpack.c.l.b16 %v1121
          %v1158 = vunpack.c.l.b16 %v1122
          %v1159 = vunpack.c.l.b16 %v1123
          %v1160 = vpack.c.b16 %v1145, %v1144
          %v1161 = vpack.c.b16 %v1147, %v1146
          %v1162 = vpack.c.b16 %v1149, %v1148
          %v1163 = vpack.c.b16 %v1151, %v1150
          %v1164 = vpack.c.b16 %v1153, %v1152
          %v1165 = vpack.c.b16 %v1155, %v1154
          %v1166 = vpack.c.b16 %v1157, %v1156
          %v1167 = vpack.c.b16 %v1159, %v1158
          %1176 = vmatpush.bf16.msra.mxu0 %v1167
          %1177 = vmatpush.bf16.msra.mxu0 %v1166
          %1178 = vmatpush.bf16.msra.mxu0 %v1165
          %1179 = vmatpush.bf16.msra.mxu0 %v1164
          %1180 = vmatpush.bf16.msra.mxu0 %v1163
          %1181 = vmatpush.bf16.msra.mxu0 %v1162
          %1182 = vmatpush.bf16.msra.mxu0 %v1161
          %1183 = vmatpush.bf16.msra.mxu0 %v1160
          %1184 = vmatmul.bf16.gmra.mxu0 %v1107
          %v1185 = vpop.f32.mrf.mxu0
          %v1186 = vadd.f32 %v1126, %v1185
          %v1187 = vpop.f32.mrf.mxu0
          %1188 = vdwg.mxu0
          %v1189 = vsel %vm867, %v1186, 0.0
          %v1190 = vrot.slane %v1189, 4
          %v1191 = vadd.f32 %v1189, %v1190
          %v1192 = vrot.slane %v1191, 2
          %v1193 = vadd.f32 %v1191, %v1192
          %v1194 = vrot.slane %v1193, 1
          %v1195 = vadd.f32 %v1193, %v1194
          %v1196 = vrcp.pop 2.0
          %v1197 = vmul.f32 2.0, %v1196
          %v1198 = vsub.f32 1.0, %v1197
          %v1199 = vmul.f32 %v1196, %v1198
          %v1200 = vadd.f32 %v1196, %v1199
          %vm1201 = vweird.f32 %v1196
          %v1202 = vsel %vm1201, %v1196, %v1200
          %v1203 = vmul.f32 %v1195, %v1202
          %v1204 = vsub.f32 %v1186, %v1203
          %v1205 = vmul.f32 %v1204, %v1204
          %v1206 = vsel %vm867, %v1205, 0.0
          %v1207 = vrot.slane %v1206, 4
          %v1208 = vadd.f32 %v1206, %v1207
          %v1209 = vrot.slane %v1208, 2
          %v1210 = vadd.f32 %v1208, %v1209
          %v1211 = vrot.slane %v1210, 1
          %v1212 = vadd.f32 %v1210, %v1211
          %v1213 = vmul.f32 %v1212, %v1202
          %v1214 = vadd.f32 %v1213, 1e-05
          %v1215 = vrsqrt.pop %v1214
          %v1216 = vmul.f32 %v1215, %v1214
          %v1217 = vmul.f32 %v1216, %v1215
          %v1218 = vmul.f32 0.5, %v1217
          %v1219 = vsub.f32 1.5, %v1218
          %v1220 = vmul.f32 %v1215, %v1219
          %vm1221 = vweird.f32 %v1214
          %vm1222 = vweird.f32 %v1215
          %vm1223 = vmor %vm1221, %vm1222
          %v1224 = vsel %vm1223, %v1215, %v1220
          %v1225 = vmul.f32 %v1204, %v1224
          %v1226 = vld [vmem:[%s10] sm:$0x1]
          %v1228 = vperm.slane %v1226, 0
          %v1230 = vmul.f32 %v1225, %v1228
          %v1231 = vld [vmem:[%s11] sm:$0x1]
          %v1233 = vperm.slane %v1231, 0
          %v1235 = vadd.f32 %v1230, %v1233
          %1236 = vst [vmem:[#allocation4] sm:$0x3] %v1235
        $region76: #{encoder_cnn_forward.1} parent=67 // pred_fallthru
          _
        // Predicated region
        $region77: #{encoder_cnn_forward.1} parent=67 // pred_check
          %p1237 = pneg %p294
        $region78: #{encoder_cnn_forward.1} parent=67 // pred_check_branch
          %1239 = sbr.rel (%p1237) target = $region80
        $region79: #{encoder_cnn_forward.1} parent=67 // pred_region
          %1241 = vsyncadd [#allocation5], 0
          %s1243 = sshll.u32 [#allocation4], 4
          %s1244 = int_to_ptr.vmem [resolvable:$true] %s1243
          %s1245 = sshll.u32 %s12, 4
          %s1246 = int_to_ptr.hbm [resolvable:$true] %s1245
          %1248 = dma.vmem_to_hbm [thread:$0]  %s1244, 32, %s1246, [#allocation5]
        $region80: #{encoder_cnn_forward.1} parent=67 // pred_fallthru
          _
        // Predicated region
        $region81: #{encoder_cnn_forward.1} parent=67 // pred_check
          %p1249 = pneg %p294
        $region82: #{encoder_cnn_forward.1} parent=67 // pred_check_branch
          %1251 = sbr.rel (%p1249) target = $region84
        $region83: #{encoder_cnn_forward.1} parent=67 // pred_region
          %1253 = dma.done [#allocation5], 32
        $region84: #{encoder_cnn_forward.1} parent=67 // pred_fallthru
          _
      $region68: #{encoder_cnn_forward.1} parent=5 // pred_fallthru
        _
      %p1254 = scmp.le.s32.totalorder 2, %s19
      // Predicated region
      $region85: #{encoder_cnn_forward.1} parent=5 // pred_check
        %p1255 = pneg %p1254
      $region86: #{encoder_cnn_forward.1} parent=5 // pred_check_branch
        %1257 = sbr.rel (%p1255) target = $region88
      $region87: #{encoder_cnn_forward.1} parent=5 // pred_region
        %s1258 = ssub.s32 %s19, 2
      $region88: #{encoder_cnn_forward.1} parent=5 // pred_fallthru
        _
    $region6: #{encoder_cnn_forward.1} parent=1 // loop_footer
      %s23 = sadd.s32 1, %s19
    $region7: #{encoder_cnn_forward.1} parent=1 // loop_footer_branch
      %18 = sbr.rel target = $region3
    $region8: #{encoder_cnn_forward.1} parent=1 // loop_exit
      _
    %1259 = vsyncpa [#allocation5], 1
    %s1260 = scalar_lea.sflag [#allocation5], 1
    %1261 = vsyncpa %s1260, 1

</llo_original>
